<compile_context>
chip_gen: v7x
topology: tpu7x:2x2x1
jax: 0.10.0
libtpu: 0.0.40
codegen_flags: <defaults>
</compile_context>

<pallas_src>
import functools

import jax
import jax.numpy as jnp
from jax.experimental import pallas as pl
from jax.experimental.pallas import tpu as pltpu


def _mlp_kernel(x_ref, res_ref, wg_ref, wu_ref, wd_ref, bd_ref, o_ref, acc_ref):
    """Fused gated-MLP kernel.

    Grid = (M_tiles, FFN_tiles).  The FFN axis is the reduction axis of the
    down projection, so the (tm, H) output block is resident across it and
    accumulated in f32 scratch.  Per step: gate and up matmuls
    (tm, H) x (H, tf), SiLU gating on EUP/VPU, then h @ Wd_slab accumulate.
    The accumulator starts at residual + bias, so the epilogue is just a cast.
    """
    k = pl.program_id(1)

    @pl.when(k == 0)
    def _():
        acc_ref[...] = (res_ref[...].astype(jnp.float32)
                        + bd_ref[...].astype(jnp.float32))

    x = x_ref[...]
    g = jnp.dot(x, wg_ref[...], preferred_element_type=jnp.float32)
    u = jnp.dot(x, wu_ref[...], preferred_element_type=jnp.float32)
    # SiLU(g) * u — exp and the approximate reciprocal both run on the EUP slot.
    h = g * pl.reciprocal(1.0 + jnp.exp(-g), approx=True) * u
    acc_ref[...] += jnp.dot(h.astype(wd_ref.dtype), wd_ref[...],
                            preferred_element_type=jnp.float32)

    @pl.when(k == pl.num_programs(1) - 1)
    def _():
        o_ref[...] = acc_ref[...].astype(o_ref.dtype)


def _physical_vmem_bytes():
    """Per-TensorCore VMEM capacity; conservative fallback if the query fails."""
    try:
        return int(pltpu.get_tpu_info().vmem_capacity_bytes)
    except Exception:
        return 64 * (1 << 20)   # safe for every current generation (v7x floor)


def _vmem_bytes(tm, tf, H, act_bytes, w_bytes, act_bufs=2):
    """Per-step VMEM footprint matching the specs actually emitted."""
    acts = (3 * tm * H + H) * act_bytes * act_bufs      # x, residual, out tiles + bias
    weights = 3 * H * tf * w_bytes * 2                  # gate/up/down slabs, double-buffered
    acc = tm * H * 4                                    # f32 resident accumulator
    temps = (3 * tm * tf * 4                            # g, u, h f32 temporaries
             + tm * tf * w_bytes                        # h cast for the MXU
             + 2 * tm * H * 4)                          # down-proj f32 result + epilogue
    return acts + weights + acc + temps


def _select_tiles(M, H, F, act_bytes, w_bytes, vmem_budget):
    """Pick (tm, tf, act_bufs): prefer large tm (weight-stream intensity), then
    large tf, then double-buffered activations — sacrificing activation
    double-buffering only when it is what blocks the bigger tile."""
    tm_cands = [c for c in (1024, 768, 512, 384, 256, 192, 128, 96, 64, 48, 32, 16, 8)
                if c <= M and M % c == 0] or [M]
    tf_cands = [c for c in (1024, 512, 256, 128) if c <= F and F % c == 0] or [F]

    choice = None
    for tm in tm_cands:
        for tf in tf_cands:
            for act_bufs in (2, 1):
                if _vmem_bytes(tm, tf, H, act_bytes, w_bytes, act_bufs) <= vmem_budget:
                    choice = (tm, tf, act_bufs)
                    break
            if choice is not None:
                break
        if choice is not None:
            break
    if choice is None:
        choice = (tm_cands[-1], tf_cands[-1], 1)
    tm, tf, act_bufs = choice

    # Megacore fix for decode-sized M: don't leave the second TensorCore idle.
    if M <= 256 and M // tm < 2:
        half = tm // 2
        if half >= 64 and M % half == 0:
            tm = half
    return tm, tf, act_bufs


@functools.partial(jax.jit, static_argnames=("tm", "tf"))
def telechat2_mlp(hidden_states, residual, w_gate, w_up, w_down, b_down,
                  *, tm=None, tf=None):
    """hidden_states, residual: (B, S, H).  Weights already in x@W layout
    (nn.Linear's (out, in) transposed ONCE at load time):
    w_gate/w_up: (H, F), w_down: (F, H), b_down: (H,)."""
    B, S, H = hidden_states.shape
    F = w_gate.shape[1]
    M = B * S

    act_bytes = jnp.dtype(hidden_states.dtype).itemsize
    w_bytes = jnp.dtype(w_gate.dtype).itemsize

    physical_vmem = _physical_vmem_bytes()
    vmem_budget = min(physical_vmem - (12 << 20), int(physical_vmem * 0.8))

    a_tm, a_tf, _ = _select_tiles(M, H, F, act_bytes, w_bytes, vmem_budget)
    tm = tm or a_tm
    tf = tf or a_tf
    assert M % tm == 0 and F % tf == 0
    act_bufs = 2 if _vmem_bytes(tm, tf, H, act_bytes, w_bytes, 2) <= vmem_budget else 1

    x2 = hidden_states.reshape(M, H)
    r2 = residual.reshape(M, H)
    b2 = b_down.reshape(1, H)

    vmem_need = _vmem_bytes(tm, tf, H, act_bytes, w_bytes, act_bufs)
    vmem_limit = int(min(max(int(vmem_need * 1.25), 32 * (1 << 20)),
                         physical_vmem - (8 << 20)))
    vmem_limit = max(vmem_limit, vmem_need)

    cost = pl.CostEstimate(
        flops=6 * M * H * F,                      # gate + up + down matmuls
        transcendentals=M * F,                    # sigmoid exp
        bytes_accessed=(3 * H * F * w_bytes) * (M // tm)   # weights re-streamed per M tile
                       + 3 * M * H * act_bytes + H * act_bytes,
    )

    # Single-buffer the k-invariant activation blocks only when VMEM is tight
    # (e.g. big tiles on v7x's 64 MiB per-TC VMEM); otherwise keep the default
    # double-buffering.
    act_pm = {} if act_bufs == 2 else {"pipeline_mode": pl.Buffered(1)}

    out = pl.pallas_call(
        _mlp_kernel,
        out_shape=jax.ShapeDtypeStruct((M, H), hidden_states.dtype),
        grid_spec=pltpu.PrefetchScalarGridSpec(
            num_scalar_prefetch=0,
            grid=(M // tm, F // tf),
            in_specs=[
                pl.BlockSpec((tm, H), lambda i, k: (i, 0), **act_pm),   # x tile
                pl.BlockSpec((tm, H), lambda i, k: (i, 0), **act_pm),   # residual tile
                pl.BlockSpec((H, tf), lambda i, k: (0, k)),             # gate-proj slab
                pl.BlockSpec((H, tf), lambda i, k: (0, k)),             # up-proj slab
                pl.BlockSpec((tf, H), lambda i, k: (k, 0)),             # down-proj slab
                pl.BlockSpec((1, H), lambda i, k: (0, 0), **act_pm),    # down-proj bias
            ],
            out_specs=pl.BlockSpec((tm, H), lambda i, k: (i, 0), **act_pm),
            scratch_shapes=[pltpu.VMEM((tm, H), jnp.float32)],
        ),
        compiler_params=pltpu.CompilerParams(
            dimension_semantics=("parallel", "arbitrary"),
            vmem_limit_bytes=vmem_limit),
        cost_estimate=cost,
    )(x2, r2, w_gate, w_up, w_down, b2)

    return out.reshape(B, S, H)


def _reference(hidden_states, residual, w_gate, w_up, w_down, b_down):
    x = hidden_states.astype(jnp.float32)
    g = x @ w_gate.astype(jnp.float32)
    u = x @ w_up.astype(jnp.float32)
    inter = (jax.nn.silu(g) * u) @ w_down.astype(jnp.float32) \
            + b_down.astype(jnp.float32)
    return residual.astype(jnp.float32) + inter   # eval-mode dropout = identity


if __name__ == "__main__":
    # Small config consistent with the module: hidden_size=128, ffn_hidden=1024.
    B, S, H, FFN = 2, 64, 128, 1024

    key = jax.random.PRNGKey(0)
    k_x, k_r, k_g, k_u, k_d, k_b = jax.random.split(key, 6)

    # bf16 activations / weights (f32 accumulation inside the kernel).
    hidden_states = jax.random.normal(k_x, (B, S, H), jnp.float32).astype(jnp.bfloat16)
    residual = jax.random.normal(k_r, (B, S, H), jnp.float32).astype(jnp.bfloat16)

    # nn.Linear weights are (out, in); stored pre-transposed ONCE as (in, out).
    w_gate = (jax.random.normal(k_g, (H, FFN), jnp.float32) * 0.02).astype(jnp.bfloat16)
    w_up   = (jax.random.normal(k_u, (H, FFN), jnp.float32) * 0.02).astype(jnp.bfloat16)
    w_down = (jax.random.normal(k_d, (FFN, H), jnp.float32) * 0.02).astype(jnp.bfloat16)
    b_down = (jax.random.normal(k_b, (H,), jnp.float32) * 0.02).astype(jnp.bfloat16)

    out = telechat2_mlp(hidden_states, residual, w_gate, w_up, w_down, b_down)
    out = jax.block_until_ready(out)

    ref = _reference(hidden_states, residual, w_gate, w_up, w_down, b_down)
    assert out.shape == (B, S, H)
    assert jnp.allclose(out.astype(jnp.float32), ref, atol=3e-2, rtol=3e-2), \
        "mismatch vs reference"

    print("KERNEL_OK")
</pallas_src>

<mosaic_0001>
module attributes {stable_mosaic.version = 11 : i64} {
  func.func @_mlp_kernel(%arg0: i32, %arg1: i32, %arg2: memref<64x128xbf16, #tpu.memory_space<vmem>>, %arg3: memref<64x128xbf16, #tpu.memory_space<vmem>>, %arg4: memref<128x1024xbf16, #tpu.memory_space<vmem>>, %arg5: memref<128x1024xbf16, #tpu.memory_space<vmem>>, %arg6: memref<1024x128xbf16, #tpu.memory_space<vmem>>, %arg7: memref<1x128xbf16, #tpu.memory_space<vmem>>, %arg8: memref<64x128xbf16, #tpu.memory_space<vmem>>, %arg9: memref<64x128xf32, #tpu.memory_space<vmem>>) attributes {dimension_semantics = [#tpu.dimension_semantics<parallel>, #tpu.dimension_semantics<arbitrary>], iteration_bounds = array<i64: 2, 1>, scalar_prefetch = 0 : i64, scratch_operands = 1 : i64, tpu.core_type = #tpu.core_type<tc>, window_params = [{transform_indices = @transform_0, window_bounds = array<i64: 64, 128>}, {transform_indices = @transform_1, window_bounds = array<i64: 64, 128>}, {transform_indices = @transform_2, window_bounds = array<i64: 128, 1024>}, {transform_indices = @transform_3, window_bounds = array<i64: 128, 1024>}, {transform_indices = @transform_4, window_bounds = array<i64: 1024, 128>}, {pipeline_mode = #tpu.pipeline_mode<synchronous>, transform_indices = @transform_5, window_bounds = array<i64: 1, 128>}, {transform_indices = @transform_6, window_bounds = array<i64: 64, 128>}]} {
    %c0_i32 = arith.constant 0 : i32
    %0 = arith.cmpi eq, %arg1, %c0_i32 : i32
    %1 = arith.extui %0 : i1 to i32
    %c0_i32_0 = arith.constant 0 : i32
    %2 = arith.cmpi ne, %1, %c0_i32_0 : i32
    scf.if %2 {
      %c0_18 = arith.constant 0 : index
      %c0_19 = arith.constant 0 : index
      %25 = vector.load %arg3[%c0_18, %c0_19] : memref<64x128xbf16, #tpu.memory_space<vmem>>, vector<64x128xbf16>
      %26 = arith.extf %25 : vector<64x128xbf16> to vector<64x128xf32>
      %c0_20 = arith.constant 0 : index
      %c0_21 = arith.constant 0 : index
      %27 = vector.load %arg7[%c0_20, %c0_21] : memref<1x128xbf16, #tpu.memory_space<vmem>>, vector<1x128xbf16>
      %28 = arith.extf %27 : vector<1x128xbf16> to vector<1x128xf32>
      %29 = vector.broadcast %28 : vector<1x128xf32> to vector<64x128xf32>
      %30 = arith.addf %26, %29 : vector<64x128xf32>
      %c0_22 = arith.constant 0 : index
      %c0_23 = arith.constant 0 : index
      %31 = vector.load %arg9[%c0_22, %c0_23] : memref<64x128xf32, #tpu.memory_space<vmem>>, vector<64x128xf32>
      tpu.vector_store %arg9[%c0_22, %c0_23], %30 {strides = array<i32>} : memref<64x128xf32, #tpu.memory_space<vmem>>, vector<64x128xf32>,
    } else {
    }
    %c0 = arith.constant 0 : index
    %c0_1 = arith.constant 0 : index
    %3 = vector.load %arg2[%c0, %c0_1] : memref<64x128xbf16, #tpu.memory_space<vmem>>, vector<64x128xbf16>
    %c0_2 = arith.constant 0 : index
    %c0_3 = arith.constant 0 : index
    %4 = vector.load %arg4[%c0_2, %c0_3] : memref<128x1024xbf16, #tpu.memory_space<vmem>>, vector<128x1024xbf16>
    %cst = arith.constant dense<0.000000e+00> : vector<64x1024xf32>
    %5 = tpu.matmul %3, %4, %cst {dimension_numbers = #tpu.dot_dimension_numbers<[1], [0], [0], [1], [0, 0, 1, 1], [], []>} : vector<64x128xbf16>, vector<128x1024xbf16>, vector<64x1024xf32> -> vector<64x1024xf32>
    %c0_4 = arith.constant 0 : index
    %c0_5 = arith.constant 0 : index
    %6 = vector.load %arg5[%c0_4, %c0_5] : memref<128x1024xbf16, #tpu.memory_space<vmem>>, vector<128x1024xbf16>
    %cst_6 = arith.constant dense<0.000000e+00> : vector<64x1024xf32>
    %7 = tpu.matmul %3, %6, %cst_6 {dimension_numbers = #tpu.dot_dimension_numbers<[1], [0], [0], [1], [0, 0, 1, 1], [], []>} : vector<64x128xbf16>, vector<128x1024xbf16>, vector<64x1024xf32> -> vector<64x1024xf32>
    %cst_7 = arith.constant 0.000000e+00 : f32
    %8 = vector.broadcast %cst_7 : f32 to vector<64x1024xf32>
    %9 = arith.subf %8, %5 : vector<64x1024xf32>
    %10 = math.exp %9 : vector<64x1024xf32>
    %cst_8 = arith.constant 1.000000e+00 : f32
    %11 = vector.broadcast %cst_8 : f32 to vector<64x1024xf32>
    %12 = arith.addf %11, %10 : vector<64x1024xf32>
    %13 = tpu.reciprocal %12 {approx = true} : vector<64x1024xf32> -> vector<64x1024xf32>
    %14 = arith.mulf %5, %13 : vector<64x1024xf32>
    %15 = arith.mulf %14, %7 : vector<64x1024xf32>
    %c0_9 = arith.constant 0 : index
    %c0_10 = arith.constant 0 : index
    %16 = vector.load %arg9[%c0_9, %c0_10] : memref<64x128xf32, #tpu.memory_space<vmem>>, vector<64x128xf32>
    %17 = arith.truncf %15 : vector<64x1024xf32> to vector<64x1024xbf16>
    %c0_11 = arith.constant 0 : index
    %c0_12 = arith.constant 0 : index
    %18 = vector.load %arg6[%c0_11, %c0_12] : memref<1024x128xbf16, #tpu.memory_space<vmem>>, vector<1024x128xbf16>
    %cst_13 = arith.constant dense<0.000000e+00> : vector<64x128xf32>
    %19 = tpu.matmul %17, %18, %cst_13 {dimension_numbers = #tpu.dot_dimension_numbers<[1], [0], [0], [1], [0, 0, 1, 1], [], []>} : vector<64x1024xbf16>, vector<1024x128xbf16>, vector<64x128xf32> -> vector<64x128xf32>
    %20 = arith.addf %16, %19 : vector<64x128xf32>
    %c0_14 = arith.constant 0 : index
    %c0_15 = arith.constant 0 : index
    %21 = vector.load %arg9[%c0_14, %c0_15] : memref<64x128xf32, #tpu.memory_space<vmem>>, vector<64x128xf32>
    tpu.vector_store %arg9[%c0_14, %c0_15], %20 {strides = array<i32>} : memref<64x128xf32, #tpu.memory_space<vmem>>, vector<64x128xf32>,
    %c0_i32_16 = arith.constant 0 : i32
    %22 = arith.cmpi eq, %arg1, %c0_i32_16 : i32
    %23 = arith.extui %22 : i1 to i32
    %c0_i32_17 = arith.constant 0 : i32
    %24 = arith.cmpi ne, %23, %c0_i32_17 : i32
    scf.if %24 {
      %c0_18 = arith.constant 0 : index
      %c0_19 = arith.constant 0 : index
      %25 = vector.load %arg9[%c0_18, %c0_19] : memref<64x128xf32, #tpu.memory_space<vmem>>, vector<64x128xf32>
      %26 = arith.truncf %25 : vector<64x128xf32> to vector<64x128xbf16>
      %c0_20 = arith.constant 0 : index
      %c0_21 = arith.constant 0 : index
      %27 = vector.load %arg8[%c0_20, %c0_21] : memref<64x128xbf16, #tpu.memory_space<vmem>>, vector<64x128xbf16>
      tpu.vector_store %arg8[%c0_20, %c0_21], %26 {strides = array<i32>} : memref<64x128xbf16, #tpu.memory_space<vmem>>, vector<64x128xbf16>,
    } else {
    }
    return
  }
  func.func @transform_0(%arg0: i32, %arg1: i32) -> (i32, i32) {
    %c0_i32 = arith.constant 0 : i32
    %c0_i32_0 = arith.constant 0 : i32
    return %arg0, %c0_i32 : i32, i32
  }
  func.func @transform_1(%arg0: i32, %arg1: i32) -> (i32, i32) {
    %c0_i32 = arith.constant 0 : i32
    %c0_i32_0 = arith.constant 0 : i32
    return %arg0, %c0_i32 : i32, i32
  }
  func.func @transform_2(%arg0: i32, %arg1: i32) -> (i32, i32) {
    %c0_i32 = arith.constant 0 : i32
    %c0_i32_0 = arith.constant 0 : i32
    return %c0_i32, %arg1 : i32, i32
  }
  func.func @transform_3(%arg0: i32, %arg1: i32) -> (i32, i32) {
    %c0_i32 = arith.constant 0 : i32
    %c0_i32_0 = arith.constant 0 : i32
    return %c0_i32, %arg1 : i32, i32
  }
  func.func @transform_4(%arg0: i32, %arg1: i32) -> (i32, i32) {
    %c0_i32 = arith.constant 0 : i32
    %c0_i32_0 = arith.constant 0 : i32
    return %arg1, %c0_i32 : i32, i32
  }
  func.func @transform_5(%arg0: i32, %arg1: i32) -> (i32, i32) {
    %c0_i32 = arith.constant 0 : i32
    %c0_i32_0 = arith.constant 0 : i32
    %c0_i32_1 = arith.constant 0 : i32
    return %c0_i32, %c0_i32_0 : i32, i32
  }
  func.func @transform_6(%arg0: i32, %arg1: i32) -> (i32, i32) {
    %c0_i32 = arith.constant 0 : i32
    %c0_i32_0 = arith.constant 0 : i32
    return %arg0, %c0_i32 : i32, i32
  }
}

</mosaic_0001>

<llo_original>
// kernel: telechat2_mlp.1
$region0: #{telechat2_mlp.1}
  #allocation0 [shape = 'u32[]', space=smem, size = 0x4, offset = 0x4, fixed_abs, tag = 'smem constant byte address 0x4 - core index']
  #allocation1 [shape = 'u32[144,128]{1,0:T(1,128)}', space=vmem, size = 0x12000, scoped, tag = 'internal scratch']
  #allocation2 [shape = 'f32[64,128]{1,0:T(8,128)}', space=vmem, size = 0x8000, scoped, tag = 'scratch operand']
  %s0 = inlined_call_operand.hbm [shape: bf16[128,128], index: 0, kind: input, shape index: {}]
  %s1 = inlined_call_operand.hbm [shape: bf16[128,128], index: 1, kind: input, shape index: {}]
  %s2 = inlined_call_operand.hbm [shape: bf16[128,1024], index: 2, kind: input, shape index: {}]
  %s3 = inlined_call_operand.hbm [shape: bf16[128,1024], index: 3, kind: input, shape index: {}]
  %s4 = inlined_call_operand.hbm [shape: bf16[1024,128], index: 4, kind: input, shape index: {}]
  %s5 = inlined_call_operand.vmem [shape: bf16[1,128], index: 5, kind: input, shape index: {}]
  %s6 = inlined_call_operand.hbm [shape: bf16[128,128], index: 6, kind: output, shape index: {}]
  %s7 = sld [smem:[#allocation0]]
  $region85: #{telechat2_mlp.1} parent=0
    _
  %s9 = ssub.s32 1, %s7
  %s10 = scalar_select 0, %s9, %s7
  $region1: #{telechat2_mlp.1} parent=0
    #allocation3 [shape = 'u8[32768]{0}', space=vmem, size = 0x8000, scoped, tag = 'input window, operand 0']
    #allocation4 [shape = 's32[2]{0}', space=sflag, size = 0x8, scoped, tag = 'scoped memory for telechat2_mlp.1']
    #allocation5 [shape = 's32[2]{0}', space=sflag, size = 0x8, scoped, tag = 'scoped memory for telechat2_mlp.1']
    #allocation6 [shape = 'u8[32768]{0}', space=vmem, size = 0x8000, scoped, tag = 'input window, operand 1']
    #allocation7 [shape = 's32[2]{0}', space=sflag, size = 0x8, scoped, tag = 'scoped memory for telechat2_mlp.1']
    #allocation8 [shape = 'u8[262144]{0}', space=vmem, size = 0x40000, scoped, tag = 'input window, operand 2, single buffered']
    #allocation9 [shape = 'u8[262144]{0}', space=vmem, size = 0x40000, scoped, tag = 'input window, operand 3, single buffered']
    #allocation10 [shape = 's32[1]{0}', space=sflag, size = 0x4, scoped, tag = 'scoped memory for telechat2_mlp.1']
    #allocation11 [shape = 'u8[262144]{0}', space=vmem, size = 0x40000, scoped, tag = 'input window, operand 4, single buffered']
    #allocation12 [shape = 'u8[32768]{0}', space=vmem, size = 0x8000, scoped, tag = 'output window, operand 0']
    %11 = vsyncpa [#allocation4], 0
    %s12 = scalar_lea.sflag [#allocation4], 1
    %13 = vsyncpa %s12, 0
    %14 = vsyncpa [#allocation7], 0
    %s15 = scalar_lea.sflag [#allocation7], 1
    %16 = vsyncpa %s15, 0
    %17 = vsyncpa [#allocation10], 0
    %18 = vsyncpa [#allocation5], 0
    %s19 = scalar_lea.sflag [#allocation5], 1
    %20 = vsyncpa %s19, 0
    loop: start=0, step=1, limit=4
    $region2: #{telechat2_mlp.1} parent=1 // loop_pre_header
      _
    $region3: #{telechat2_mlp.1} parent=1 // loop_header
      %s22 = sphi 0, %s26
      %p23 = scmp.ge.s32.totalorder %s22, 4
      %s29 = sphi 0, %s41
      %s30 = sphi 0, %s37
      %s31 = sphi 0, %s29
      %s32 = sphi 0, %s30
      %s33 = sphi 0, %s31
      %s34 = sphi 0, %s32
      %s44 = sphi 0, %s46
      %s47 = sphi 0, %s44
      %s48 = sphi 0, %s47
      %s64 = sphi 0, %s48
      %s70 = sphi 0, %s72
      %s73 = sphi 0, %s70
      %s74 = sphi 0, %s73
      %s90 = sphi 0, %s74
      %s96 = sphi 0, %s98
      %s99 = sphi 0, %s96
      %s100 = sphi 0, %s99
      %s116 = sphi 0, %s100
      %s122 = sphi 0, %s124
      %s125 = sphi 0, %s122
      %s126 = sphi 0, %s125
      %s142 = sphi 0, %s126
      %s148 = sphi 0, %s150
      %s151 = sphi 0, %s148
      %s152 = sphi 0, %s151
      %s168 = sphi 0, %s152
      %s172 = sphi 0, %s172
      %s174 = sphi 0, %s172
      %s175 = sphi 0, %s174
      %s189 = sphi 0, %s175
      %s195 = sphi 0, %s197
      %s198 = sphi 0, %s195
      %s199 = sphi 0, %s198
      %s215 = sphi 0, %s199
    $region4: #{telechat2_mlp.1} parent=1 // loop_header_branch
      %25 = sbr.rel (%p23) target = $region8
    $region5: #{telechat2_mlp.1} parent=1 // loop_body
      %s27 = ssub.s32 %s22, 1
      %s28 = ssub.s32 %s22, 2
      %s35 = sadd.s32 1, %s30
      %p36 = scmp.ge.s32.totalorder %s35, 1
      %s37 = scalar_select %p36, 0, %s35
      %s38 = sadd.s32 1, %s29
      %s39 = scalar_select %p36, %s38, %s29
      %p40 = scmp.ge.s32.totalorder %s39, 2
      %s41 = scalar_select %p40, 0, %s39
      %s42 = ssub.s32 %s29, %s41
      %p43 = scmp.eq.s32.totalorder %s42, 0
      %s45 = sadd.s32 %s44, 1
      %s46 = scalar_select %p43, %s44, %s45
      %p49 = pneg %p43
      %p50 = scmp.eq.s32.totalorder %s22, 1
      %p51 = por %p49, %p50
      %p52 = scmp.ne.s32.totalorder %s44, %s47
      %p53 = scmp.eq.s32.totalorder %s22, 0
      %p54 = por %p52, %p53
      %p55 = scmp.ne.s32.totalorder %s44, %s47
      %p56 = scmp.eq.s32.totalorder %s27, 1
      %p57 = por %p55, %p56
      %p58 = scmp.ne.s32.totalorder %s47, %s48
      %p59 = scmp.eq.s32.totalorder %s27, 0
      %p60 = por %p58, %p59
      %p61 = scmp.ne.s32.totalorder %s47, %s48
      %p62 = scmp.eq.s32.totalorder %s28, 1
      %p63 = por %p61, %p62
      %p65 = scmp.ne.s32.totalorder %s48, %s64
      %p66 = scmp.eq.s32.totalorder %s28, 0
      %p67 = por %p65, %p66
      %s68 = ssub.s32 %s29, %s41
      %p69 = scmp.eq.s32.totalorder %s68, 0
      %s71 = sadd.s32 %s70, 1
      %s72 = scalar_select %p69, %s70, %s71
      %p75 = pneg %p69
      %p76 = scmp.eq.s32.totalorder %s22, 1
      %p77 = por %p75, %p76
      %p78 = scmp.ne.s32.totalorder %s70, %s73
      %p79 = scmp.eq.s32.totalorder %s22, 0
      %p80 = por %p78, %p79
      %p81 = scmp.ne.s32.totalorder %s70, %s73
      %p82 = scmp.eq.s32.totalorder %s27, 1
      %p83 = por %p81, %p82
      %p84 = scmp.ne.s32.totalorder %s73, %s74
      %p85 = scmp.eq.s32.totalorder %s27, 0
      %p86 = por %p84, %p85
      %p87 = scmp.ne.s32.totalorder %s73, %s74
      %p88 = scmp.eq.s32.totalorder %s28, 1
      %p89 = por %p87, %p88
      %p91 = scmp.ne.s32.totalorder %s74, %s90
      %p92 = scmp.eq.s32.totalorder %s28, 0
      %p93 = por %p91, %p92
      %s94 = ssub.s32 %s30, %s37
      %p95 = scmp.eq.s32.totalorder %s94, 0
      %s97 = sadd.s32 %s96, 1
      %s98 = scalar_select %p95, %s96, %s97
      %p101 = pneg %p95
      %p102 = scmp.eq.s32.totalorder %s22, 1
      %p103 = por %p101, %p102
      %p104 = scmp.ne.s32.totalorder %s96, %s99
      %p105 = scmp.eq.s32.totalorder %s22, 0
      %p106 = por %p104, %p105
      %p107 = scmp.ne.s32.totalorder %s96, %s99
      %p108 = scmp.eq.s32.totalorder %s27, 1
      %p109 = por %p107, %p108
      %p110 = scmp.ne.s32.totalorder %s99, %s100
      %p111 = scmp.eq.s32.totalorder %s27, 0
      %p112 = por %p110, %p111
      %p113 = scmp.ne.s32.totalorder %s99, %s100
      %p114 = scmp.eq.s32.totalorder %s28, 1
      %p115 = por %p113, %p114
      %p117 = scmp.ne.s32.totalorder %s100, %s116
      %p118 = scmp.eq.s32.totalorder %s28, 0
      %p119 = por %p117, %p118
      %s120 = ssub.s32 %s30, %s37
      %p121 = scmp.eq.s32.totalorder %s120, 0
      %s123 = sadd.s32 %s122, 1
      %s124 = scalar_select %p121, %s122, %s123
      %p127 = pneg %p121
      %p128 = scmp.eq.s32.totalorder %s22, 1
      %p129 = por %p127, %p128
      %p130 = scmp.ne.s32.totalorder %s122, %s125
      %p131 = scmp.eq.s32.totalorder %s22, 0
      %p132 = por %p130, %p131
      %p133 = scmp.ne.s32.totalorder %s122, %s125
      %p134 = scmp.eq.s32.totalorder %s27, 1
      %p135 = por %p133, %p134
      %p136 = scmp.ne.s32.totalorder %s125, %s126
      %p137 = scmp.eq.s32.totalorder %s27, 0
      %p138 = por %p136, %p137
      %p139 = scmp.ne.s32.totalorder %s125, %s126
      %p140 = scmp.eq.s32.totalorder %s28, 1
      %p141 = por %p139, %p140
      %p143 = scmp.ne.s32.totalorder %s126, %s142
      %p144 = scmp.eq.s32.totalorder %s28, 0
      %p145 = por %p143, %p144
      %s146 = ssub.s32 %s30, %s37
      %p147 = scmp.eq.s32.totalorder %s146, 0
      %s149 = sadd.s32 %s148, 1
      %s150 = scalar_select %p147, %s148, %s149
      %p153 = pneg %p147
      %p154 = scmp.eq.s32.totalorder %s22, 1
      %p155 = por %p153, %p154
      %p156 = scmp.ne.s32.totalorder %s148, %s151
      %p157 = scmp.eq.s32.totalorder %s22, 0
      %p158 = por %p156, %p157
      %p159 = scmp.ne.s32.totalorder %s148, %s151
      %p160 = scmp.eq.s32.totalorder %s27, 1
      %p161 = por %p159, %p160
      %p162 = scmp.ne.s32.totalorder %s151, %s152
      %p163 = scmp.eq.s32.totalorder %s27, 0
      %p164 = por %p162, %p163
      %p165 = scmp.ne.s32.totalorder %s151, %s152
      %p166 = scmp.eq.s32.totalorder %s28, 1
      %p167 = por %p165, %p166
      %p169 = scmp.ne.s32.totalorder %s152, %s168
      %p170 = scmp.eq.s32.totalorder %s28, 0
      %p171 = por %p169, %p170
      %s173 = sadd.s32 %s172, 1
      %p176 = scmp.eq.s32.totalorder %s22, 1
      %p177 = scmp.ne.s32.totalorder %s172, %s174
      %p178 = scmp.eq.s32.totalorder %s22, 0
      %p179 = por %p177, %p178
      %p180 = scmp.ne.s32.totalorder %s172, %s174
      %p181 = scmp.eq.s32.totalorder %s27, 1
      %p182 = por %p180, %p181
      %p183 = scmp.ne.s32.totalorder %s174, %s175
      %p184 = scmp.eq.s32.totalorder %s27, 0
      %p185 = por %p183, %p184
      %p186 = scmp.ne.s32.totalorder %s174, %s175
      %p187 = scmp.eq.s32.totalorder %s28, 1
      %p188 = por %p186, %p187
      %p190 = scmp.ne.s32.totalorder %s175, %s189
      %p191 = scmp.eq.s32.totalorder %s28, 0
      %p192 = por %p190, %p191
      %s193 = ssub.s32 %s29, %s41
      %p194 = scmp.eq.s32.totalorder %s193, 0
      %s196 = sadd.s32 %s195, 1
      %s197 = scalar_select %p194, %s195, %s196
      %p200 = pneg %p194
      %p201 = scmp.eq.s32.totalorder %s22, 1
      %p202 = por %p200, %p201
      %p203 = scmp.ne.s32.totalorder %s195, %s198
      %p204 = scmp.eq.s32.totalorder %s22, 0
      %p205 = por %p203, %p204
      %p206 = scmp.ne.s32.totalorder %s195, %s198
      %p207 = scmp.eq.s32.totalorder %s27, 1
      %p208 = por %p206, %p207
      %p209 = scmp.ne.s32.totalorder %s198, %s199
      %p210 = scmp.eq.s32.totalorder %s27, 0
      %p211 = por %p209, %p210
      %p212 = scmp.ne.s32.totalorder %s198, %s199
      %p213 = scmp.eq.s32.totalorder %s28, 1
      %p214 = por %p212, %p213
      %p216 = scmp.ne.s32.totalorder %s199, %s215
      %p217 = scmp.eq.s32.totalorder %s28, 0
      %p218 = por %p216, %p217
      %p219 = scmp.le.s32.totalorder 1, %s22
      %p220 = scmp.lt.s32.totalorder %s22, 3
      %p221 = pnand %p219, %p220
      %p222 = pneg %p221
      // Predicated region
      $region9: #{telechat2_mlp.1} parent=5 // pred_check
        _
      $region10: #{telechat2_mlp.1} parent=5 // pred_check_branch
        %224 = sbr.rel (%p221) target = $region12
      $region11: #{telechat2_mlp.1} parent=5 // pred_region
        %s225 = ssub.s32 %s22, 1
        // Predicated region
        $region13: #{telechat2_mlp.1} parent=11 // pred_check
          %p226 = pneg %p112
        $region14: #{telechat2_mlp.1} parent=11 // pred_check_branch
          %228 = sbr.rel (%p226) target = $region16
        $region15: #{telechat2_mlp.1} parent=11 // pred_region
          %s229 = smul.u32 8, %s32
          %s231 = ssub.s32 8192, 8192
          %232 = vsyncadd [#allocation7], %s231
          %s233 = smul.addr %s229, 64
          %s234 = scalar_lea.hbm %s2, %s233
          %s235 = sshll.u32 [#allocation8], 4
          %s236 = int_to_ptr.vmem [resolvable:$true] %s235
          %241 = dma.hbm_to_vmem [thread:$0]  %s234, 8192, %s236, [#allocation7], 512, 512, 32
        $region16: #{telechat2_mlp.1} parent=11 // pred_fallthru
          _
        // Predicated region
        $region17: #{telechat2_mlp.1} parent=11 // pred_check
          %p242 = pneg %p138
        $region18: #{telechat2_mlp.1} parent=11 // pred_check_branch
          %244 = sbr.rel (%p242) target = $region20
        $region19: #{telechat2_mlp.1} parent=11 // pred_region
          %s245 = smul.u32 8, %s32
          %s247 = ssub.s32 8192, 8192
          %248 = vsyncadd [#allocation10], %s247
          %s249 = smul.addr %s245, 64
          %s250 = scalar_lea.hbm %s3, %s249
          %s251 = sshll.u32 [#allocation9], 4
          %s252 = int_to_ptr.vmem [resolvable:$true] %s251
          %257 = dma.hbm_to_vmem [thread:$0]  %s250, 8192, %s252, [#allocation10], 512, 512, 32
        $region20: #{telechat2_mlp.1} parent=11 // pred_fallthru
          _
        // Predicated region
        $region21: #{telechat2_mlp.1} parent=11 // pred_check
          %p258 = pneg %p164
        $region22: #{telechat2_mlp.1} parent=11 // pred_check_branch
          %260 = sbr.rel (%p258) target = $region24
        $region23: #{telechat2_mlp.1} parent=11 // pred_region
          %s261 = smul.u32 128, %s32
          %s263 = ssub.s32 8192, 8192
          %264 = vsyncadd [#allocation10], %s263
          %s265 = smul.addr %s261, 64
          %s266 = scalar_lea.hbm %s4, %s265
          %s267 = sshll.u32 [#allocation11], 4
          %s268 = int_to_ptr.vmem [resolvable:$true] %s267
          %273 = dma.hbm_to_vmem [thread:$0]  %s266, 8192, %s268, [#allocation10], 64, 64, 4
        $region24: #{telechat2_mlp.1} parent=11 // pred_fallthru
          _
        // Predicated region
        $region25: #{telechat2_mlp.1} parent=11 // pred_check
          %p274 = pneg %p185
        $region26: #{telechat2_mlp.1} parent=11 // pred_check_branch
          %276 = sbr.rel (%p274) target = $region28
        $region27: #{telechat2_mlp.1} parent=11 // pred_region
          _
        $region28: #{telechat2_mlp.1} parent=11 // pred_fallthru
          _
      $region12: #{telechat2_mlp.1} parent=5 // pred_fallthru
        _
      %p277 = scmp.lt.s32.totalorder %s22, 2
      // Predicated region
      $region29: #{telechat2_mlp.1} parent=5 // pred_check
        %p278 = pneg %p277
      $region30: #{telechat2_mlp.1} parent=5 // pred_check_branch
        %280 = sbr.rel (%p278) target = $region32
      $region31: #{telechat2_mlp.1} parent=5 // pred_region
        // Predicated region
        $region33: #{telechat2_mlp.1} parent=31 // pred_check
          %p281 = pneg %p54
        $region34: #{telechat2_mlp.1} parent=31 // pred_check_branch
          %283 = sbr.rel (%p281) target = $region36
        $region35: #{telechat2_mlp.1} parent=31 // pred_region
          %s284 = sand.u32 %s44, 1
          %s285 = scalar_lea.sflag [#allocation4], %s284
          %s286 = sand.u32 %s44, 1
          %s287 = smul.addr %s286, 32
          %s288 = scalar_lea.vmem [#allocation3], %s287
          %s289 = smul.u32 8, %s29
          %s291 = ssub.s32 512, 512
          %292 = vsyncadd %s285, %s291
          %s293 = smul.addr %s289, 64
          %s294 = scalar_lea.hbm %s0, %s293
          %s295 = sshll.u32 %s288, 4
          %s296 = int_to_ptr.vmem [resolvable:$true] %s295
          %301 = dma.hbm_to_vmem [thread:$0]  %s294, 512, %s296, %s285, 64, 64, 4
        $region36: #{telechat2_mlp.1} parent=31 // pred_fallthru
          _
        // Predicated region
        $region37: #{telechat2_mlp.1} parent=31 // pred_check
          %p302 = pneg %p80
        $region38: #{telechat2_mlp.1} parent=31 // pred_check_branch
          %304 = sbr.rel (%p302) target = $region40
        $region39: #{telechat2_mlp.1} parent=31 // pred_region
          %s305 = sand.u32 %s22, 1
          %s306 = scalar_lea.sflag [#allocation7], %s305
          %s307 = sand.u32 %s70, 1
          %s308 = smul.addr %s307, 32
          %s309 = scalar_lea.vmem [#allocation6], %s308
          %s310 = smul.u32 8, %s29
          %s312 = ssub.s32 512, 512
          %313 = vsyncadd %s306, %s312
          %s314 = smul.addr %s310, 64
          %s315 = scalar_lea.hbm %s1, %s314
          %s316 = sshll.u32 %s309, 4
          %s317 = int_to_ptr.vmem [resolvable:$true] %s316
          %322 = dma.hbm_to_vmem [thread:$0]  %s315, 512, %s317, %s306, 64, 64, 4
        $region40: #{telechat2_mlp.1} parent=31 // pred_fallthru
          _
      $region32: #{telechat2_mlp.1} parent=5 // pred_fallthru
        _
      %p323 = scmp.le.s32.totalorder 1, %s22
      %p324 = scmp.lt.s32.totalorder %s22, 3
      %p325 = pnand %p323, %p324
      %p326 = pneg %p325
      // Predicated region
      $region41: #{telechat2_mlp.1} parent=5 // pred_check
        _
      $region42: #{telechat2_mlp.1} parent=5 // pred_check_branch
        %328 = sbr.rel (%p325) target = $region44
      $region43: #{telechat2_mlp.1} parent=5 // pred_region
        %s329 = ssub.s32 %s22, 1
        %s330 = sand.u32 %s47, 1
        %s331 = scalar_lea.sflag [#allocation4], %s330
        %s332 = sand.u32 %s47, 1
        %s333 = smul.addr %s332, 32
        %s334 = scalar_lea.vmem [#allocation3], %s333
        // Predicated region
        $region45: #{telechat2_mlp.1} parent=43 // pred_check
          %p335 = pneg %p60
        $region46: #{telechat2_mlp.1} parent=43 // pred_check_branch
          %337 = sbr.rel (%p335) target = $region48
        $region47: #{telechat2_mlp.1} parent=43 // pred_region
          %338 = dma.done %s331, 512
        $region48: #{telechat2_mlp.1} parent=43 // pred_fallthru
          _
        %s339 = sand.u32 %s27, 1
        %s340 = scalar_lea.sflag [#allocation7], %s339
        %s341 = sand.u32 %s73, 1
        %s342 = smul.addr %s341, 32
        %s343 = scalar_lea.vmem [#allocation6], %s342
        // Predicated region
        $region49: #{telechat2_mlp.1} parent=43 // pred_check
          %p344 = pneg %p86
        $region50: #{telechat2_mlp.1} parent=43 // pred_check_branch
          %346 = sbr.rel (%p344) target = $region52
        $region51: #{telechat2_mlp.1} parent=43 // pred_region
          %347 = dma.done %s340, 512
        $region52: #{telechat2_mlp.1} parent=43 // pred_fallthru
          _
        // Predicated region
        $region53: #{telechat2_mlp.1} parent=43 // pred_check
          %p348 = pneg %p112
        $region54: #{telechat2_mlp.1} parent=43 // pred_check_branch
          %350 = sbr.rel (%p348) target = $region56
        $region55: #{telechat2_mlp.1} parent=43 // pred_region
          %351 = dma.done [#allocation7], 8192
        $region56: #{telechat2_mlp.1} parent=43 // pred_fallthru
          _
        // Predicated region
        $region57: #{telechat2_mlp.1} parent=43 // pred_check
          %p352 = pneg %p138
        $region58: #{telechat2_mlp.1} parent=43 // pred_check_branch
          %354 = sbr.rel (%p352) target = $region60
        $region59: #{telechat2_mlp.1} parent=43 // pred_region
          %355 = dma.done [#allocation10], 8192
        $region60: #{telechat2_mlp.1} parent=43 // pred_fallthru
          _
        // Predicated region
        $region61: #{telechat2_mlp.1} parent=43 // pred_check
          %p356 = pneg %p164
        $region62: #{telechat2_mlp.1} parent=43 // pred_check_branch
          %358 = sbr.rel (%p356) target = $region64
        $region63: #{telechat2_mlp.1} parent=43 // pred_region
          %359 = dma.done [#allocation10], 8192
        $region64: #{telechat2_mlp.1} parent=43 // pred_fallthru
          _
        %s360 = sand.u32 %s47, 1
        %s361 = scalar_lea.sflag [#allocation4], %s360
        %s362 = sand.u32 %s47, 1
        %s363 = smul.addr %s362, 32
        %s364 = scalar_lea.vmem [#allocation3], %s363
        %p365 = pneg %p60
        %p366 = pneg %p57
        %s367 = sand.u32 %s27, 1
        %s368 = scalar_lea.sflag [#allocation7], %s367
        %s369 = sand.u32 %s73, 1
        %s370 = smul.addr %s369, 32
        %s371 = scalar_lea.vmem [#allocation6], %s370
        %p372 = pneg %p86
        %p373 = pneg %p83
        %p374 = pneg %p112
        %p375 = pneg %p109
        %p376 = pneg %p138
        %p377 = pneg %p135
        %p378 = pneg %p164
        %p379 = pneg %p161
        %p380 = pneg %p185
        %p381 = pneg %p182
        %p382 = pneg %p211
        %p383 = pneg %p208
        %s384 = sand.u32 %s198, 1
        %s385 = scalar_lea.sflag [#allocation5], %s384
        %s386 = sand.u32 %s198, 1
        %s387 = smul.addr %s386, 32
        %s388 = scalar_lea.vmem [#allocation12], %s387
        %s389 = smul.u32 8, %s31
        %s390 = smul.u32 8, %s31
        %s391 = smul.u32 8, %s32
        %s392 = smul.u32 8, %s32
        %s393 = smul.u32 128, %s32
        %s394 = smul.u32 8, %s31
        %p396 = scmp.eq.s32.totalorder %s32, 0
        // Predicated region
        $region65: #{telechat2_mlp.1} parent=43 // pred_check
          %p397 = pneg %p396
        $region66: #{telechat2_mlp.1} parent=43 // pred_check_branch
          %399 = sbr.rel (%p397) target = $region68
        $region67: #{telechat2_mlp.1} parent=43 // pred_region
          %v400 = vld [vmem:[%s343] sm:$0xf]
          %v401 = vld [vmem:[%s343 + $0x4] sm:$0xf]
          %v402 = vld [vmem:[%s343 + $0x8] sm:$0xf]
          %v403 = vld [vmem:[%s343 + $0xc] sm:$0xf]
          %v404 = vld [vmem:[%s343 + $0x10] sm:$0xf]
          %v405 = vld [vmem:[%s343 + $0x14] sm:$0xf]
          %v406 = vld [vmem:[%s343 + $0x18] sm:$0xf]
          %v407 = vld [vmem:[%s343 + $0x1c] sm:$0xf]
          %v408 = vunpack.c.l.bf16 %v400
          %v409 = vunpack.c.l.bf16 %v401
          %v410 = vunpack.c.l.bf16 %v402
          %v411 = vunpack.c.l.bf16 %v403
          %v412 = vunpack.c.l.bf16 %v404
          %v413 = vunpack.c.l.bf16 %v405
          %v414 = vunpack.c.l.bf16 %v406
          %v415 = vunpack.c.l.bf16 %v407
          %v416 = vld [vmem:[%s5] sm:$0x1]
          %v417 = vunpack.c.l.bf16 %v416
          %v418 = vlaneseq
          %v419 = vshrl.u32 %v418, 7
          %v420 = vsub.s32 0, %v419
          %v421 = vrot.slane %v417, %v420
          %v422 = vadd.f32 %v408, %v421
          %v423 = vadd.f32 %v409, %v421
          %v424 = vadd.f32 %v410, %v421
          %v425 = vadd.f32 %v411, %v421
          %v426 = vadd.f32 %v412, %v421
          %v427 = vadd.f32 %v413, %v421
          %v428 = vadd.f32 %v414, %v421
          %v429 = vadd.f32 %v415, %v421
          %430 = vst [vmem:[#allocation2] sm:$0xff] %v422
          %431 = vst [vmem:[#allocation2 + $0x8] sm:$0xff] %v423
          %432 = vst [vmem:[#allocation2 + $0x10] sm:$0xff] %v424
          %433 = vst [vmem:[#allocation2 + $0x18] sm:$0xff] %v425
          %434 = vst [vmem:[#allocation2 + $0x20] sm:$0xff] %v426
          %435 = vst [vmem:[#allocation2 + $0x28] sm:$0xff] %v427
          %436 = vst [vmem:[#allocation2 + $0x30] sm:$0xff] %v428
          %437 = vst [vmem:[#allocation2 + $0x38] sm:$0xff] %v429
        $region68: #{telechat2_mlp.1} parent=43 // pred_fallthru
          _
        %v438 = vld [vmem:[%s334] sm:$0xf]
        %v439 = vld [vmem:[%s334 + $0x4] sm:$0xf]
        %v440 = vld [vmem:[%s334 + $0x8] sm:$0xf]
        %v441 = vld [vmem:[%s334 + $0xc] sm:$0xf]
        %v442 = vld [vmem:[%s334 + $0x10] sm:$0xf]
        %v443 = vld [vmem:[%s334 + $0x14] sm:$0xf]
        %v444 = vld [vmem:[%s334 + $0x18] sm:$0xf]
        %v445 = vld [vmem:[%s334 + $0x1c] sm:$0xf]
        %v446 = vld [vmem:[#allocation8] sm:$0xff]
        %v447 = vld [vmem:[#allocation8 + $0x8] sm:$0xff]
        %v448 = vld [vmem:[#allocation8 + $0x10] sm:$0xff]
        %v449 = vld [vmem:[#allocation8 + $0x18] sm:$0xff]
        %v450 = vld [vmem:[#allocation8 + $0x20] sm:$0xff]
        %v451 = vld [vmem:[#allocation8 + $0x28] sm:$0xff]
        %v452 = vld [vmem:[#allocation8 + $0x30] sm:$0xff]
        %v453 = vld [vmem:[#allocation8 + $0x38] sm:$0xff]
        %v454 = vld [vmem:[#allocation8 + $0x40] sm:$0xff]
        %v455 = vld [vmem:[#allocation8 + $0x48] sm:$0xff]
        %v456 = vld [vmem:[#allocation8 + $0x50] sm:$0xff]
        %v457 = vld [vmem:[#allocation8 + $0x58] sm:$0xff]
        %v458 = vld [vmem:[#allocation8 + $0x60] sm:$0xff]
        %v459 = vld [vmem:[#allocation8 + $0x68] sm:$0xff]
        %v460 = vld [vmem:[#allocation8 + $0x70] sm:$0xff]
        %v461 = vld [vmem:[#allocation8 + $0x78] sm:$0xff]
        %v462 = vld [vmem:[#allocation8 + $0x80] sm:$0xff]
        %v463 = vld [vmem:[#allocation8 + $0x88] sm:$0xff]
        %v464 = vld [vmem:[#allocation8 + $0x90] sm:$0xff]
        %v465 = vld [vmem:[#allocation8 + $0x98] sm:$0xff]
        %v466 = vld [vmem:[#allocation8 + $0xa0] sm:$0xff]
        %v467 = vld [vmem:[#allocation8 + $0xa8] sm:$0xff]
        %v468 = vld [vmem:[#allocation8 + $0xb0] sm:$0xff]
        %v469 = vld [vmem:[#allocation8 + $0xb8] sm:$0xff]
        %v470 = vld [vmem:[#allocation8 + $0xc0] sm:$0xff]
        %v471 = vld [vmem:[#allocation8 + $0xc8] sm:$0xff]
        %v472 = vld [vmem:[#allocation8 + $0xd0] sm:$0xff]
        %v473 = vld [vmem:[#allocation8 + $0xd8] sm:$0xff]
        %v474 = vld [vmem:[#allocation8 + $0xe0] sm:$0xff]
        %v475 = vld [vmem:[#allocation8 + $0xe8] sm:$0xff]
        %v476 = vld [vmem:[#allocation8 + $0xf0] sm:$0xff]
        %v477 = vld [vmem:[#allocation8 + $0xf8] sm:$0xff]
        %v478 = vld [vmem:[#allocation8 + $0x100] sm:$0xff]
        %v479 = vld [vmem:[#allocation8 + $0x108] sm:$0xff]
        %v480 = vld [vmem:[#allocation8 + $0x110] sm:$0xff]
        %v481 = vld [vmem:[#allocation8 + $0x118] sm:$0xff]
        %v482 = vld [vmem:[#allocation8 + $0x120] sm:$0xff]
        %v483 = vld [vmem:[#allocation8 + $0x128] sm:$0xff]
        %v484 = vld [vmem:[#allocation8 + $0x130] sm:$0xff]
        %v485 = vld [vmem:[#allocation8 + $0x138] sm:$0xff]
        %v486 = vld [vmem:[#allocation8 + $0x140] sm:$0xff]
        %v487 = vld [vmem:[#allocation8 + $0x148] sm:$0xff]
        %v488 = vld [vmem:[#allocation8 + $0x150] sm:$0xff]
        %v489 = vld [vmem:[#allocation8 + $0x158] sm:$0xff]
        %v490 = vld [vmem:[#allocation8 + $0x160] sm:$0xff]
        %v491 = vld [vmem:[#allocation8 + $0x168] sm:$0xff]
        %v492 = vld [vmem:[#allocation8 + $0x170] sm:$0xff]
        %v493 = vld [vmem:[#allocation8 + $0x178] sm:$0xff]
        %v494 = vld [vmem:[#allocation8 + $0x180] sm:$0xff]
        %v495 = vld [vmem:[#allocation8 + $0x188] sm:$0xff]
        %v496 = vld [vmem:[#allocation8 + $0x190] sm:$0xff]
        %v497 = vld [vmem:[#allocation8 + $0x198] sm:$0xff]
        %v498 = vld [vmem:[#allocation8 + $0x1a0] sm:$0xff]
        %v499 = vld [vmem:[#allocation8 + $0x1a8] sm:$0xff]
        %v500 = vld [vmem:[#allocation8 + $0x1b0] sm:$0xff]
        %v501 = vld [vmem:[#allocation8 + $0x1b8] sm:$0xff]
        %v502 = vld [vmem:[#allocation8 + $0x1c0] sm:$0xff]
        %v503 = vld [vmem:[#allocation8 + $0x1c8] sm:$0xff]
        %v504 = vld [vmem:[#allocation8 + $0x1d0] sm:$0xff]
        %v505 = vld [vmem:[#allocation8 + $0x1d8] sm:$0xff]
        %v506 = vld [vmem:[#allocation8 + $0x1e0] sm:$0xff]
        %v507 = vld [vmem:[#allocation8 + $0x1e8] sm:$0xff]
        %v508 = vld [vmem:[#allocation8 + $0x1f0] sm:$0xff]
        %v509 = vld [vmem:[#allocation8 + $0x1f8] sm:$0xff]
        %v518 = vunpack.c.l.b16 %v438
        %v519 = vunpack.c.l.b16 %v439
        %v520 = vunpack.c.l.b16 %v440
        %v521 = vunpack.c.l.b16 %v441
        %v522 = vunpack.c.l.b16 %v442
        %v523 = vunpack.c.l.b16 %v443
        %v524 = vunpack.c.l.b16 %v444
        %v525 = vunpack.c.l.b16 %v445
        %v526 = vpack.c.b16 %v519, %v518
        %v527 = vpack.c.b16 %v521, %v520
        %v528 = vpack.c.b16 %v523, %v522
        %v529 = vpack.c.b16 %v525, %v524
        %v598 = vunpack.c.l.b16 %v446
        %v599 = vunpack.c.h.b16 %v446
        %v600 = vunpack.c.l.b16 %v447
        %v601 = vunpack.c.h.b16 %v447
        %v602 = vunpack.c.l.b16 %v448
        %v603 = vunpack.c.h.b16 %v448
        %v604 = vunpack.c.l.b16 %v449
        %v605 = vunpack.c.h.b16 %v449
        %v606 = vunpack.c.l.b16 %v450
        %v607 = vunpack.c.h.b16 %v450
        %v608 = vunpack.c.l.b16 %v451
        %v609 = vunpack.c.h.b16 %v451
        %v610 = vunpack.c.l.b16 %v452
        %v611 = vunpack.c.h.b16 %v452
        %v612 = vunpack.c.l.b16 %v453
        %v613 = vunpack.c.h.b16 %v453
        %v614 = vunpack.c.l.b16 %v454
        %v615 = vunpack.c.h.b16 %v454
        %v616 = vunpack.c.l.b16 %v455
        %v617 = vunpack.c.h.b16 %v455
        %v618 = vunpack.c.l.b16 %v456
        %v619 = vunpack.c.h.b16 %v456
        %v620 = vunpack.c.l.b16 %v457
        %v621 = vunpack.c.h.b16 %v457
        %v622 = vunpack.c.l.b16 %v458
        %v623 = vunpack.c.h.b16 %v458
        %v624 = vunpack.c.l.b16 %v459
        %v625 = vunpack.c.h.b16 %v459
        %v626 = vunpack.c.l.b16 %v460
        %v627 = vunpack.c.h.b16 %v460
        %v628 = vunpack.c.l.b16 %v461
        %v629 = vunpack.c.h.b16 %v461
        %v630 = vunpack.c.l.b16 %v462
        %v631 = vunpack.c.h.b16 %v462
        %v632 = vunpack.c.l.b16 %v463
        %v633 = vunpack.c.h.b16 %v463
        %v634 = vunpack.c.l.b16 %v464
        %v635 = vunpack.c.h.b16 %v464
        %v636 = vunpack.c.l.b16 %v465
        %v637 = vunpack.c.h.b16 %v465
        %v638 = vunpack.c.l.b16 %v466
        %v639 = vunpack.c.h.b16 %v466
        %v640 = vunpack.c.l.b16 %v467
        %v641 = vunpack.c.h.b16 %v467
        %v642 = vunpack.c.l.b16 %v468
        %v643 = vunpack.c.h.b16 %v468
        %v644 = vunpack.c.l.b16 %v469
        %v645 = vunpack.c.h.b16 %v469
        %v646 = vunpack.c.l.b16 %v470
        %v647 = vunpack.c.h.b16 %v470
        %v648 = vunpack.c.l.b16 %v471
        %v649 = vunpack.c.h.b16 %v471
        %v650 = vunpack.c.l.b16 %v472
        %v651 = vunpack.c.h.b16 %v472
        %v652 = vunpack.c.l.b16 %v473
        %v653 = vunpack.c.h.b16 %v473
        %v654 = vunpack.c.l.b16 %v474
        %v655 = vunpack.c.h.b16 %v474
        %v656 = vunpack.c.l.b16 %v475
        %v657 = vunpack.c.h.b16 %v475
        %v658 = vunpack.c.l.b16 %v476
        %v659 = vunpack.c.h.b16 %v476
        %v660 = vunpack.c.l.b16 %v477
        %v661 = vunpack.c.h.b16 %v477
        %v662 = vunpack.c.l.b16 %v478
        %v663 = vunpack.c.h.b16 %v478
        %v664 = vunpack.c.l.b16 %v479
        %v665 = vunpack.c.h.b16 %v479
        %v666 = vunpack.c.l.b16 %v480
        %v667 = vunpack.c.h.b16 %v480
        %v668 = vunpack.c.l.b16 %v481
        %v669 = vunpack.c.h.b16 %v481
        %v670 = vunpack.c.l.b16 %v482
        %v671 = vunpack.c.h.b16 %v482
        %v672 = vunpack.c.l.b16 %v483
        %v673 = vunpack.c.h.b16 %v483
        %v674 = vunpack.c.l.b16 %v484
        %v675 = vunpack.c.h.b16 %v484
        %v676 = vunpack.c.l.b16 %v485
        %v677 = vunpack.c.h.b16 %v485
        %v678 = vunpack.c.l.b16 %v486
        %v679 = vunpack.c.h.b16 %v486
        %v680 = vunpack.c.l.b16 %v487
        %v681 = vunpack.c.h.b16 %v487
        %v682 = vunpack.c.l.b16 %v488
        %v683 = vunpack.c.h.b16 %v488
        %v684 = vunpack.c.l.b16 %v489
        %v685 = vunpack.c.h.b16 %v489
        %v686 = vunpack.c.l.b16 %v490
        %v687 = vunpack.c.h.b16 %v490
        %v688 = vunpack.c.l.b16 %v491
        %v689 = vunpack.c.h.b16 %v491
        %v690 = vunpack.c.l.b16 %v492
        %v691 = vunpack.c.h.b16 %v492
        %v692 = vunpack.c.l.b16 %v493
        %v693 = vunpack.c.h.b16 %v493
        %v694 = vunpack.c.l.b16 %v494
        %v695 = vunpack.c.h.b16 %v494
        %v696 = vunpack.c.l.b16 %v495
        %v697 = vunpack.c.h.b16 %v495
        %v698 = vunpack.c.l.b16 %v496
        %v699 = vunpack.c.h.b16 %v496
        %v700 = vunpack.c.l.b16 %v497
        %v701 = vunpack.c.h.b16 %v497
        %v702 = vunpack.c.l.b16 %v498
        %v703 = vunpack.c.h.b16 %v498
        %v704 = vunpack.c.l.b16 %v499
        %v705 = vunpack.c.h.b16 %v499
        %v706 = vunpack.c.l.b16 %v500
        %v707 = vunpack.c.h.b16 %v500
        %v708 = vunpack.c.l.b16 %v501
        %v709 = vunpack.c.h.b16 %v501
        %v710 = vunpack.c.l.b16 %v502
        %v711 = vunpack.c.h.b16 %v502
        %v712 = vunpack.c.l.b16 %v503
        %v713 = vunpack.c.h.b16 %v503
        %v714 = vunpack.c.l.b16 %v504
        %v715 = vunpack.c.h.b16 %v504
        %v716 = vunpack.c.l.b16 %v505
        %v717 = vunpack.c.h.b16 %v505
        %v718 = vunpack.c.l.b16 %v506
        %v719 = vunpack.c.h.b16 %v506
        %v720 = vunpack.c.l.b16 %v507
        %v721 = vunpack.c.h.b16 %v507
        %v722 = vunpack.c.l.b16 %v508
        %v723 = vunpack.c.h.b16 %v508
        %v724 = vunpack.c.l.b16 %v509
        %v725 = vunpack.c.h.b16 %v509
        %v726 = vpack.c.b16 %v606, %v598
        %v727 = vpack.c.b16 %v607, %v599
        %v728 = vpack.c.b16 %v608, %v600
        %v729 = vpack.c.b16 %v609, %v601
        %v730 = vpack.c.b16 %v610, %v602
        %v731 = vpack.c.b16 %v611, %v603
        %v732 = vpack.c.b16 %v612, %v604
        %v733 = vpack.c.b16 %v613, %v605
        %v734 = vpack.c.b16 %v622, %v614
        %v735 = vpack.c.b16 %v623, %v615
        %v736 = vpack.c.b16 %v624, %v616
        %v737 = vpack.c.b16 %v625, %v617
        %v738 = vpack.c.b16 %v626, %v618
        %v739 = vpack.c.b16 %v627, %v619
        %v740 = vpack.c.b16 %v628, %v620
        %v741 = vpack.c.b16 %v629, %v621
        %v742 = vpack.c.b16 %v638, %v630
        %v743 = vpack.c.b16 %v639, %v631
        %v744 = vpack.c.b16 %v640, %v632
        %v745 = vpack.c.b16 %v641, %v633
        %v746 = vpack.c.b16 %v642, %v634
        %v747 = vpack.c.b16 %v643, %v635
        %v748 = vpack.c.b16 %v644, %v636
        %v749 = vpack.c.b16 %v645, %v637
        %v750 = vpack.c.b16 %v654, %v646
        %v751 = vpack.c.b16 %v655, %v647
        %v752 = vpack.c.b16 %v656, %v648
        %v753 = vpack.c.b16 %v657, %v649
        %v754 = vpack.c.b16 %v658, %v650
        %v755 = vpack.c.b16 %v659, %v651
        %v756 = vpack.c.b16 %v660, %v652
        %v757 = vpack.c.b16 %v661, %v653
        %v758 = vpack.c.b16 %v670, %v662
        %v759 = vpack.c.b16 %v671, %v663
        %v760 = vpack.c.b16 %v672, %v664
        %v761 = vpack.c.b16 %v673, %v665
        %v762 = vpack.c.b16 %v674, %v666
        %v763 = vpack.c.b16 %v675, %v667
        %v764 = vpack.c.b16 %v676, %v668
        %v765 = vpack.c.b16 %v677, %v669
        %v766 = vpack.c.b16 %v686, %v678
        %v767 = vpack.c.b16 %v687, %v679
        %v768 = vpack.c.b16 %v688, %v680
        %v769 = vpack.c.b16 %v689, %v681
        %v770 = vpack.c.b16 %v690, %v682
        %v771 = vpack.c.b16 %v691, %v683
        %v772 = vpack.c.b16 %v692, %v684
        %v773 = vpack.c.b16 %v693, %v685
        %v774 = vpack.c.b16 %v702, %v694
        %v775 = vpack.c.b16 %v703, %v695
        %v776 = vpack.c.b16 %v704, %v696
        %v777 = vpack.c.b16 %v705, %v697
        %v778 = vpack.c.b16 %v706, %v698
        %v779 = vpack.c.b16 %v707, %v699
        %v780 = vpack.c.b16 %v708, %v700
        %v781 = vpack.c.b16 %v709, %v701
        %v782 = vpack.c.b16 %v718, %v710
        %v783 = vpack.c.b16 %v719, %v711
        %v784 = vpack.c.b16 %v720, %v712
        %v785 = vpack.c.b16 %v721, %v713
        %v786 = vpack.c.b16 %v722, %v714
        %v787 = vpack.c.b16 %v723, %v715
        %v788 = vpack.c.b16 %v724, %v716
        %v789 = vpack.c.b16 %v725, %v717
        %854 = vmatprep.subr.bf16.mxu0 %v727
        %855 = vmatpush1.bf16.msra.mxu0 %v726
        %856 = vmatprep.subr.bf16.mxu0 %v735
        %857 = vmatpush1.bf16.msra.mxu0 %v734
        %858 = vmatprep.subr.bf16.mxu0 %v743
        %859 = vmatpush1.bf16.msra.mxu0 %v742
        %860 = vmatprep.subr.bf16.mxu0 %v751
        %861 = vmatpush1.bf16.msra.mxu0 %v750
        %862 = vmatprep.subr.bf16.mxu0 %v759
        %863 = vmatpush1.bf16.msra.mxu0 %v758
        %864 = vmatprep.subr.bf16.mxu0 %v767
        %865 = vmatpush1.bf16.msra.mxu0 %v766
        %866 = vmatprep.subr.bf16.mxu0 %v775
        %867 = vmatpush1.bf16.msra.mxu0 %v774
        %868 = vmatprep.subr.bf16.mxu0 %v783
        %869 = vmatpush1.bf16.msra.mxu0 %v782
        %870 = vmatprep.subr.bf16.mxu0 0
        %871 = vmatpush1.bf16.msra.mxu0 0
        %872 = vmatprep.subr.bf16.mxu0 0
        %873 = vmatpush1.bf16.msra.mxu0 0
        %874 = vmatprep.subr.bf16.mxu0 0
        %875 = vmatpush1.bf16.msra.mxu0 0
        %876 = vmatprep.subr.bf16.mxu0 0
        %877 = vmatpush1.bf16.msra.mxu0 0
        %878 = vmatprep.subr.bf16.mxu0 0
        %879 = vmatpush1.bf16.msra.mxu0 0
        %880 = vmatprep.subr.bf16.mxu0 0
        %881 = vmatpush1.bf16.msra.mxu0 0
        %882 = vmatprep.subr.bf16.mxu0 0
        %883 = vmatpush1.bf16.msra.mxu0 0
        %884 = vmatprep.subr.bf16.mxu0 0
        %885 = vmatpush1.bf16.msra.mxu0 0
        %886 = vmatprep.mubr.bf16.mxu0 0
        %887 = vmatmul.mubr.bf16.gmra.mrb[0].mxu0 %v526
        %v888 = vpop.f32.mrb[0].mxu0
        %v889 = vadd.f32 0.0, %v888
        %v890 = vpop.f32.mrb[0].mxu0
        %v891 = vadd.f32 0.0, %v890
        %v892 = vpop.f32.mrb[0].mxu0
        %v893 = vadd.f32 0.0, %v892
        %v894 = vpop.f32.mrb[0].mxu0
        %v895 = vadd.f32 0.0, %v894
        %896 = vmatprep.mubr.bf16.mxu0 0
        %897 = vmatmul.mubr.bf16.gmra.mrb[0].mxu0 %v527
        %v898 = vpop.f32.mrb[0].mxu0
        %v899 = vadd.f32 0.0, %v898
        %v900 = vpop.f32.mrb[0].mxu0
        %v901 = vadd.f32 0.0, %v900
        %v902 = vpop.f32.mrb[0].mxu0
        %v903 = vadd.f32 0.0, %v902
        %v904 = vpop.f32.mrb[0].mxu0
        %v905 = vadd.f32 0.0, %v904
        %906 = vmatprep.mubr.bf16.mxu0 0
        %907 = vmatmul.mubr.bf16.gmra.mrb[0].mxu0 %v528
        %v908 = vpop.f32.mrb[0].mxu0
        %v909 = vadd.f32 0.0, %v908
        %v910 = vpop.f32.mrb[0].mxu0
        %v911 = vadd.f32 0.0, %v910
        %v912 = vpop.f32.mrb[0].mxu0
        %v913 = vadd.f32 0.0, %v912
        %v914 = vpop.f32.mrb[0].mxu0
        %v915 = vadd.f32 0.0, %v914
        %916 = vmatprep.mubr.bf16.mxu0 0
        %917 = vmatmul.mubr.bf16.gmra.mrb[0].mxu0 %v529
        %v918 = vpop.f32.mrb[0].mxu0
        %v919 = vadd.f32 0.0, %v918
        %v920 = vpop.f32.mrb[0].mxu0
        %v921 = vadd.f32 0.0, %v920
        %v922 = vpop.f32.mrb[0].mxu0
        %v923 = vadd.f32 0.0, %v922
        %v924 = vpop.f32.mrb[0].mxu0
        %v925 = vadd.f32 0.0, %v924
        %926 = vdwg.mxu0
        %927 = vmatprep.subr.bf16.mxu0 %v729
        %928 = vmatpush1.bf16.msra.mxu0 %v728
        %929 = vmatprep.subr.bf16.mxu0 %v737
        %930 = vmatpush1.bf16.msra.mxu0 %v736
        %931 = vmatprep.subr.bf16.mxu0 %v745
        %932 = vmatpush1.bf16.msra.mxu0 %v744
        %933 = vmatprep.subr.bf16.mxu0 %v753
        %934 = vmatpush1.bf16.msra.mxu0 %v752
        %935 = vmatprep.subr.bf16.mxu0 %v761
        %936 = vmatpush1.bf16.msra.mxu0 %v760
        %937 = vmatprep.subr.bf16.mxu0 %v769
        %938 = vmatpush1.bf16.msra.mxu0 %v768
        %939 = vmatprep.subr.bf16.mxu0 %v777
        %940 = vmatpush1.bf16.msra.mxu0 %v776
        %941 = vmatprep.subr.bf16.mxu0 %v785
        %942 = vmatpush1.bf16.msra.mxu0 %v784
        %943 = vmatprep.subr.bf16.mxu0 0
        %944 = vmatpush1.bf16.msra.mxu0 0
        %945 = vmatprep.subr.bf16.mxu0 0
        %946 = vmatpush1.bf16.msra.mxu0 0
        %947 = vmatprep.subr.bf16.mxu0 0
        %948 = vmatpush1.bf16.msra.mxu0 0
        %949 = vmatprep.subr.bf16.mxu0 0
        %950 = vmatpush1.bf16.msra.mxu0 0
        %951 = vmatprep.subr.bf16.mxu0 0
        %952 = vmatpush1.bf16.msra.mxu0 0
        %953 = vmatprep.subr.bf16.mxu0 0
        %954 = vmatpush1.bf16.msra.mxu0 0
        %955 = vmatprep.subr.bf16.mxu0 0
        %956 = vmatpush1.bf16.msra.mxu0 0
        %957 = vmatprep.subr.bf16.mxu0 0
        %958 = vmatpush1.bf16.msra.mxu0 0
        %959 = vmatprep.mubr.bf16.mxu0 0
        %960 = vmatmul.mubr.bf16.gmra.mrb[0].mxu0 %v526
        %v961 = vpop.f32.mrb[0].mxu0
        %v962 = vadd.f32 0.0, %v961
        %v963 = vpop.f32.mrb[0].mxu0
        %v964 = vadd.f32 0.0, %v963
        %v965 = vpop.f32.mrb[0].mxu0
        %v966 = vadd.f32 0.0, %v965
        %v967 = vpop.f32.mrb[0].mxu0
        %v968 = vadd.f32 0.0, %v967
        %969 = vmatprep.mubr.bf16.mxu0 0
        %970 = vmatmul.mubr.bf16.gmra.mrb[0].mxu0 %v527
        %v971 = vpop.f32.mrb[0].mxu0
        %v972 = vadd.f32 0.0, %v971
        %v973 = vpop.f32.mrb[0].mxu0
        %v974 = vadd.f32 0.0, %v973
        %v975 = vpop.f32.mrb[0].mxu0
        %v976 = vadd.f32 0.0, %v975
        %v977 = vpop.f32.mrb[0].mxu0
        %v978 = vadd.f32 0.0, %v977
        %979 = vmatprep.mubr.bf16.mxu0 0
        %980 = vmatmul.mubr.bf16.gmra.mrb[0].mxu0 %v528
        %v981 = vpop.f32.mrb[0].mxu0
        %v982 = vadd.f32 0.0, %v981
        %v983 = vpop.f32.mrb[0].mxu0
        %v984 = vadd.f32 0.0, %v983
        %v985 = vpop.f32.mrb[0].mxu0
        %v986 = vadd.f32 0.0, %v985
        %v987 = vpop.f32.mrb[0].mxu0
        %v988 = vadd.f32 0.0, %v987
        %989 = vmatprep.mubr.bf16.mxu0 0
        %990 = vmatmul.mubr.bf16.gmra.mrb[0].mxu0 %v529
        %v991 = vpop.f32.mrb[0].mxu0
        %v992 = vadd.f32 0.0, %v991
        %v993 = vpop.f32.mrb[0].mxu0
        %v994 = vadd.f32 0.0, %v993
        %v995 = vpop.f32.mrb[0].mxu0
        %v996 = vadd.f32 0.0, %v995
        %v997 = vpop.f32.mrb[0].mxu0
        %v998 = vadd.f32 0.0, %v997
        %999 = vdwg.mxu0
        %1000 = vmatprep.subr.bf16.mxu0 %v731
        %1001 = vmatpush1.bf16.msra.mxu0 %v730
        %1002 = vmatprep.subr.bf16.mxu0 %v739
        %1003 = vmatpush1.bf16.msra.mxu0 %v738
        %1004 = vmatprep.subr.bf16.mxu0 %v747
        %1005 = vmatpush1.bf16.msra.mxu0 %v746
        %1006 = vmatprep.subr.bf16.mxu0 %v755
        %1007 = vmatpush1.bf16.msra.mxu0 %v754
        %1008 = vmatprep.subr.bf16.mxu0 %v763
        %1009 = vmatpush1.bf16.msra.mxu0 %v762
        %1010 = vmatprep.subr.bf16.mxu0 %v771
        %1011 = vmatpush1.bf16.msra.mxu0 %v770
        %1012 = vmatprep.subr.bf16.mxu0 %v779
        %1013 = vmatpush1.bf16.msra.mxu0 %v778
        %1014 = vmatprep.subr.bf16.mxu0 %v787
        %1015 = vmatpush1.bf16.msra.mxu0 %v786
        %1016 = vmatprep.subr.bf16.mxu0 0
        %1017 = vmatpush1.bf16.msra.mxu0 0
        %1018 = vmatprep.subr.bf16.mxu0 0
        %1019 = vmatpush1.bf16.msra.mxu0 0
        %1020 = vmatprep.subr.bf16.mxu0 0
        %1021 = vmatpush1.bf16.msra.mxu0 0
        %1022 = vmatprep.subr.bf16.mxu0 0
        %1023 = vmatpush1.bf16.msra.mxu0 0
        %1024 = vmatprep.subr.bf16.mxu0 0
        %1025 = vmatpush1.bf16.msra.mxu0 0
        %1026 = vmatprep.subr.bf16.mxu0 0
        %1027 = vmatpush1.bf16.msra.mxu0 0
        %1028 = vmatprep.subr.bf16.mxu0 0
        %1029 = vmatpush1.bf16.msra.mxu0 0
        %1030 = vmatprep.subr.bf16.mxu0 0
        %1031 = vmatpush1.bf16.msra.mxu0 0
        %1032 = vmatprep.mubr.bf16.mxu0 0
        %1033 = vmatmul.mubr.bf16.gmra.mrb[0].mxu0 %v526
        %v1034 = vpop.f32.mrb[0].mxu0
        %v1035 = vadd.f32 0.0, %v1034
        %v1036 = vpop.f32.mrb[0].mxu0
        %v1037 = vadd.f32 0.0, %v1036
        %v1038 = vpop.f32.mrb[0].mxu0
        %v1039 = vadd.f32 0.0, %v1038
        %v1040 = vpop.f32.mrb[0].mxu0
        %v1041 = vadd.f32 0.0, %v1040
        %1042 = vmatprep.mubr.bf16.mxu0 0
        %1043 = vmatmul.mubr.bf16.gmra.mrb[0].mxu0 %v527
        %v1044 = vpop.f32.mrb[0].mxu0
        %v1045 = vadd.f32 0.0, %v1044
        %v1046 = vpop.f32.mrb[0].mxu0
        %v1047 = vadd.f32 0.0, %v1046
        %v1048 = vpop.f32.mrb[0].mxu0
        %v1049 = vadd.f32 0.0, %v1048
        %v1050 = vpop.f32.mrb[0].mxu0
        %v1051 = vadd.f32 0.0, %v1050
        %1052 = vmatprep.mubr.bf16.mxu0 0
        %1053 = vmatmul.mubr.bf16.gmra.mrb[0].mxu0 %v528
        %v1054 = vpop.f32.mrb[0].mxu0
        %v1055 = vadd.f32 0.0, %v1054
        %v1056 = vpop.f32.mrb[0].mxu0
        %v1057 = vadd.f32 0.0, %v1056
        %v1058 = vpop.f32.mrb[0].mxu0
        %v1059 = vadd.f32 0.0, %v1058
        %v1060 = vpop.f32.mrb[0].mxu0
        %v1061 = vadd.f32 0.0, %v1060
        %1062 = vmatprep.mubr.bf16.mxu0 0
        %1063 = vmatmul.mubr.bf16.gmra.mrb[0].mxu0 %v529
        %v1064 = vpop.f32.mrb[0].mxu0
        %v1065 = vadd.f32 0.0, %v1064
        %v1066 = vpop.f32.mrb[0].mxu0
        %v1067 = vadd.f32 0.0, %v1066
        %v1068 = vpop.f32.mrb[0].mxu0
        %v1069 = vadd.f32 0.0, %v1068
        %v1070 = vpop.f32.mrb[0].mxu0
        %v1071 = vadd.f32 0.0, %v1070
        %1072 = vdwg.mxu0
        %1073 = vmatprep.subr.bf16.mxu0 %v733
        %1074 = vmatpush1.bf16.msra.mxu0 %v732
        %1075 = vmatprep.subr.bf16.mxu0 %v741
        %1076 = vmatpush1.bf16.msra.mxu0 %v740
        %1077 = vmatprep.subr.bf16.mxu0 %v749
        %1078 = vmatpush1.bf16.msra.mxu0 %v748
        %1079 = vmatprep.subr.bf16.mxu0 %v757
        %1080 = vmatpush1.bf16.msra.mxu0 %v756
        %1081 = vmatprep.subr.bf16.mxu0 %v765
        %1082 = vmatpush1.bf16.msra.mxu0 %v764
        %1083 = vmatprep.subr.bf16.mxu0 %v773
        %1084 = vmatpush1.bf16.msra.mxu0 %v772
        %1085 = vmatprep.subr.bf16.mxu0 %v781
        %1086 = vmatpush1.bf16.msra.mxu0 %v780
        %1087 = vmatprep.subr.bf16.mxu0 %v789
        %1088 = vmatpush1.bf16.msra.mxu0 %v788
        %1089 = vmatprep.subr.bf16.mxu0 0
        %1090 = vmatpush1.bf16.msra.mxu0 0
        %1091 = vmatprep.subr.bf16.mxu0 0
        %1092 = vmatpush1.bf16.msra.mxu0 0
        %1093 = vmatprep.subr.bf16.mxu0 0
        %1094 = vmatpush1.bf16.msra.mxu0 0
        %1095 = vmatprep.subr.bf16.mxu0 0
        %1096 = vmatpush1.bf16.msra.mxu0 0
        %1097 = vmatprep.subr.bf16.mxu0 0
        %1098 = vmatpush1.bf16.msra.mxu0 0
        %1099 = vmatprep.subr.bf16.mxu0 0
        %1100 = vmatpush1.bf16.msra.mxu0 0
        %1101 = vmatprep.subr.bf16.mxu0 0
        %1102 = vmatpush1.bf16.msra.mxu0 0
        %1103 = vmatprep.subr.bf16.mxu0 0
        %1104 = vmatpush1.bf16.msra.mxu0 0
        %1105 = vmatprep.mubr.bf16.mxu0 0
        %1106 = vmatmul.mubr.bf16.gmra.mrb[0].mxu0 %v526
        %v1107 = vpop.f32.mrb[0].mxu0
        %v1108 = vadd.f32 0.0, %v1107
        %v1109 = vpop.f32.mrb[0].mxu0
        %v1110 = vadd.f32 0.0, %v1109
        %v1111 = vpop.f32.mrb[0].mxu0
        %v1112 = vadd.f32 0.0, %v1111
        %v1113 = vpop.f32.mrb[0].mxu0
        %v1114 = vadd.f32 0.0, %v1113
        %1115 = vmatprep.mubr.bf16.mxu0 0
        %1116 = vmatmul.mubr.bf16.gmra.mrb[0].mxu0 %v527
        %v1117 = vpop.f32.mrb[0].mxu0
        %v1118 = vadd.f32 0.0, %v1117
        %v1119 = vpop.f32.mrb[0].mxu0
        %v1120 = vadd.f32 0.0, %v1119
        %v1121 = vpop.f32.mrb[0].mxu0
        %v1122 = vadd.f32 0.0, %v1121
        %v1123 = vpop.f32.mrb[0].mxu0
        %v1124 = vadd.f32 0.0, %v1123
        %1125 = vmatprep.mubr.bf16.mxu0 0
        %1126 = vmatmul.mubr.bf16.gmra.mrb[0].mxu0 %v528
        %v1127 = vpop.f32.mrb[0].mxu0
        %v1128 = vadd.f32 0.0, %v1127
        %v1129 = vpop.f32.mrb[0].mxu0
        %v1130 = vadd.f32 0.0, %v1129
        %v1131 = vpop.f32.mrb[0].mxu0
        %v1132 = vadd.f32 0.0, %v1131
        %v1133 = vpop.f32.mrb[0].mxu0
        %v1134 = vadd.f32 0.0, %v1133
        %1135 = vmatprep.mubr.bf16.mxu0 0
        %1136 = vmatmul.mubr.bf16.gmra.mrb[0].mxu0 %v529
        %v1137 = vpop.f32.mrb[0].mxu0
        %v1138 = vadd.f32 0.0, %v1137
        %v1139 = vpop.f32.mrb[0].mxu0
        %v1140 = vadd.f32 0.0, %v1139
        %v1141 = vpop.f32.mrb[0].mxu0
        %v1142 = vadd.f32 0.0, %v1141
        %v1143 = vpop.f32.mrb[0].mxu0
        %v1144 = vadd.f32 0.0, %v1143
        %1145 = vdwg.mxu0
        %v1146 = vld [vmem:[#allocation9] sm:$0xff]
        %v1147 = vld [vmem:[#allocation9 + $0x8] sm:$0xff]
        %v1148 = vld [vmem:[#allocation9 + $0x10] sm:$0xff]
        %v1149 = vld [vmem:[#allocation9 + $0x18] sm:$0xff]
        %v1150 = vld [vmem:[#allocation9 + $0x20] sm:$0xff]
        %v1151 = vld [vmem:[#allocation9 + $0x28] sm:$0xff]
        %v1152 = vld [vmem:[#allocation9 + $0x30] sm:$0xff]
        %v1153 = vld [vmem:[#allocation9 + $0x38] sm:$0xff]
        %v1154 = vld [vmem:[#allocation9 + $0x40] sm:$0xff]
        %v1155 = vld [vmem:[#allocation9 + $0x48] sm:$0xff]
        %v1156 = vld [vmem:[#allocation9 + $0x50] sm:$0xff]
        %v1157 = vld [vmem:[#allocation9 + $0x58] sm:$0xff]
        %v1158 = vld [vmem:[#allocation9 + $0x60] sm:$0xff]
        %v1159 = vld [vmem:[#allocation9 + $0x68] sm:$0xff]
        %v1160 = vld [vmem:[#allocation9 + $0x70] sm:$0xff]
        %v1161 = vld [vmem:[#allocation9 + $0x78] sm:$0xff]
        %v1162 = vld [vmem:[#allocation9 + $0x80] sm:$0xff]
        %v1163 = vld [vmem:[#allocation9 + $0x88] sm:$0xff]
        %v1164 = vld [vmem:[#allocation9 + $0x90] sm:$0xff]
        %v1165 = vld [vmem:[#allocation9 + $0x98] sm:$0xff]
        %v1166 = vld [vmem:[#allocation9 + $0xa0] sm:$0xff]
        %v1167 = vld [vmem:[#allocation9 + $0xa8] sm:$0xff]
        %v1168 = vld [vmem:[#allocation9 + $0xb0] sm:$0xff]
        %v1169 = vld [vmem:[#allocation9 + $0xb8] sm:$0xff]
        %v1170 = vld [vmem:[#allocation9 + $0xc0] sm:$0xff]
        %v1171 = vld [vmem:[#allocation9 + $0xc8] sm:$0xff]
        %v1172 = vld [vmem:[#allocation9 + $0xd0] sm:$0xff]
        %v1173 = vld [vmem:[#allocation9 + $0xd8] sm:$0xff]
        %v1174 = vld [vmem:[#allocation9 + $0xe0] sm:$0xff]
        %v1175 = vld [vmem:[#allocation9 + $0xe8] sm:$0xff]
        %v1176 = vld [vmem:[#allocation9 + $0xf0] sm:$0xff]
        %v1177 = vld [vmem:[#allocation9 + $0xf8] sm:$0xff]
        %v1178 = vld [vmem:[#allocation9 + $0x100] sm:$0xff]
        %v1179 = vld [vmem:[#allocation9 + $0x108] sm:$0xff]
        %v1180 = vld [vmem:[#allocation9 + $0x110] sm:$0xff]
        %v1181 = vld [vmem:[#allocation9 + $0x118] sm:$0xff]
        %v1182 = vld [vmem:[#allocation9 + $0x120] sm:$0xff]
        %v1183 = vld [vmem:[#allocation9 + $0x128] sm:$0xff]
        %v1184 = vld [vmem:[#allocation9 + $0x130] sm:$0xff]
        %v1185 = vld [vmem:[#allocation9 + $0x138] sm:$0xff]
        %v1186 = vld [vmem:[#allocation9 + $0x140] sm:$0xff]
        %v1187 = vld [vmem:[#allocation9 + $0x148] sm:$0xff]
        %v1188 = vld [vmem:[#allocation9 + $0x150] sm:$0xff]
        %v1189 = vld [vmem:[#allocation9 + $0x158] sm:$0xff]
        %v1190 = vld [vmem:[#allocation9 + $0x160] sm:$0xff]
        %v1191 = vld [vmem:[#allocation9 + $0x168] sm:$0xff]
        %v1192 = vld [vmem:[#allocation9 + $0x170] sm:$0xff]
        %v1193 = vld [vmem:[#allocation9 + $0x178] sm:$0xff]
        %v1194 = vld [vmem:[#allocation9 + $0x180] sm:$0xff]
        %v1195 = vld [vmem:[#allocation9 + $0x188] sm:$0xff]
        %v1196 = vld [vmem:[#allocation9 + $0x190] sm:$0xff]
        %v1197 = vld [vmem:[#allocation9 + $0x198] sm:$0xff]
        %v1198 = vld [vmem:[#allocation9 + $0x1a0] sm:$0xff]
        %v1199 = vld [vmem:[#allocation9 + $0x1a8] sm:$0xff]
        %v1200 = vld [vmem:[#allocation9 + $0x1b0] sm:$0xff]
        %v1201 = vld [vmem:[#allocation9 + $0x1b8] sm:$0xff]
        %v1202 = vld [vmem:[#allocation9 + $0x1c0] sm:$0xff]
        %v1203 = vld [vmem:[#allocation9 + $0x1c8] sm:$0xff]
        %v1204 = vld [vmem:[#allocation9 + $0x1d0] sm:$0xff]
        %v1205 = vld [vmem:[#allocation9 + $0x1d8] sm:$0xff]
        %v1206 = vld [vmem:[#allocation9 + $0x1e0] sm:$0xff]
        %v1207 = vld [vmem:[#allocation9 + $0x1e8] sm:$0xff]
        %v1208 = vld [vmem:[#allocation9 + $0x1f0] sm:$0xff]
        %v1209 = vld [vmem:[#allocation9 + $0x1f8] sm:$0xff]
        %v1274 = vunpack.c.l.b16 %v1146
        %v1275 = vunpack.c.h.b16 %v1146
        %v1276 = vunpack.c.l.b16 %v1147
        %v1277 = vunpack.c.h.b16 %v1147
        %v1278 = vunpack.c.l.b16 %v1148
        %v1279 = vunpack.c.h.b16 %v1148
        %v1280 = vunpack.c.l.b16 %v1149
        %v1281 = vunpack.c.h.b16 %v1149
        %v1282 = vunpack.c.l.b16 %v1150
        %v1283 = vunpack.c.h.b16 %v1150
        %v1284 = vunpack.c.l.b16 %v1151
        %v1285 = vunpack.c.h.b16 %v1151
        %v1286 = vunpack.c.l.b16 %v1152
        %v1287 = vunpack.c.h.b16 %v1152
        %v1288 = vunpack.c.l.b16 %v1153
        %v1289 = vunpack.c.h.b16 %v1153
        %v1290 = vunpack.c.l.b16 %v1154
        %v1291 = vunpack.c.h.b16 %v1154
        %v1292 = vunpack.c.l.b16 %v1155
        %v1293 = vunpack.c.h.b16 %v1155
        %v1294 = vunpack.c.l.b16 %v1156
        %v1295 = vunpack.c.h.b16 %v1156
        %v1296 = vunpack.c.l.b16 %v1157
        %v1297 = vunpack.c.h.b16 %v1157
        %v1298 = vunpack.c.l.b16 %v1158
        %v1299 = vunpack.c.h.b16 %v1158
        %v1300 = vunpack.c.l.b16 %v1159
        %v1301 = vunpack.c.h.b16 %v1159
        %v1302 = vunpack.c.l.b16 %v1160
        %v1303 = vunpack.c.h.b16 %v1160
        %v1304 = vunpack.c.l.b16 %v1161
        %v1305 = vunpack.c.h.b16 %v1161
        %v1306 = vunpack.c.l.b16 %v1162
        %v1307 = vunpack.c.h.b16 %v1162
        %v1308 = vunpack.c.l.b16 %v1163
        %v1309 = vunpack.c.h.b16 %v1163
        %v1310 = vunpack.c.l.b16 %v1164
        %v1311 = vunpack.c.h.b16 %v1164
        %v1312 = vunpack.c.l.b16 %v1165
        %v1313 = vunpack.c.h.b16 %v1165
        %v1314 = vunpack.c.l.b16 %v1166
        %v1315 = vunpack.c.h.b16 %v1166
        %v1316 = vunpack.c.l.b16 %v1167
        %v1317 = vunpack.c.h.b16 %v1167
        %v1318 = vunpack.c.l.b16 %v1168
        %v1319 = vunpack.c.h.b16 %v1168
        %v1320 = vunpack.c.l.b16 %v1169
        %v1321 = vunpack.c.h.b16 %v1169
        %v1322 = vunpack.c.l.b16 %v1170
        %v1323 = vunpack.c.h.b16 %v1170
        %v1324 = vunpack.c.l.b16 %v1171
        %v1325 = vunpack.c.h.b16 %v1171
        %v1326 = vunpack.c.l.b16 %v1172
        %v1327 = vunpack.c.h.b16 %v1172
        %v1328 = vunpack.c.l.b16 %v1173
        %v1329 = vunpack.c.h.b16 %v1173
        %v1330 = vunpack.c.l.b16 %v1174
        %v1331 = vunpack.c.h.b16 %v1174
        %v1332 = vunpack.c.l.b16 %v1175
        %v1333 = vunpack.c.h.b16 %v1175
        %v1334 = vunpack.c.l.b16 %v1176
        %v1335 = vunpack.c.h.b16 %v1176
        %v1336 = vunpack.c.l.b16 %v1177
        %v1337 = vunpack.c.h.b16 %v1177
        %v1338 = vunpack.c.l.b16 %v1178
        %v1339 = vunpack.c.h.b16 %v1178
        %v1340 = vunpack.c.l.b16 %v1179
        %v1341 = vunpack.c.h.b16 %v1179
        %v1342 = vunpack.c.l.b16 %v1180
        %v1343 = vunpack.c.h.b16 %v1180
        %v1344 = vunpack.c.l.b16 %v1181
        %v1345 = vunpack.c.h.b16 %v1181
        %v1346 = vunpack.c.l.b16 %v1182
        %v1347 = vunpack.c.h.b16 %v1182
        %v1348 = vunpack.c.l.b16 %v1183
        %v1349 = vunpack.c.h.b16 %v1183
        %v1350 = vunpack.c.l.b16 %v1184
        %v1351 = vunpack.c.h.b16 %v1184
        %v1352 = vunpack.c.l.b16 %v1185
        %v1353 = vunpack.c.h.b16 %v1185
        %v1354 = vunpack.c.l.b16 %v1186
        %v1355 = vunpack.c.h.b16 %v1186
        %v1356 = vunpack.c.l.b16 %v1187
        %v1357 = vunpack.c.h.b16 %v1187
        %v1358 = vunpack.c.l.b16 %v1188
        %v1359 = vunpack.c.h.b16 %v1188
        %v1360 = vunpack.c.l.b16 %v1189
        %v1361 = vunpack.c.h.b16 %v1189
        %v1362 = vunpack.c.l.b16 %v1190
        %v1363 = vunpack.c.h.b16 %v1190
        %v1364 = vunpack.c.l.b16 %v1191
        %v1365 = vunpack.c.h.b16 %v1191
        %v1366 = vunpack.c.l.b16 %v1192
        %v1367 = vunpack.c.h.b16 %v1192
        %v1368 = vunpack.c.l.b16 %v1193
        %v1369 = vunpack.c.h.b16 %v1193
        %v1370 = vunpack.c.l.b16 %v1194
        %v1371 = vunpack.c.h.b16 %v1194
        %v1372 = vunpack.c.l.b16 %v1195
        %v1373 = vunpack.c.h.b16 %v1195
        %v1374 = vunpack.c.l.b16 %v1196
        %v1375 = vunpack.c.h.b16 %v1196
        %v1376 = vunpack.c.l.b16 %v1197
        %v1377 = vunpack.c.h.b16 %v1197
        %v1378 = vunpack.c.l.b16 %v1198
        %v1379 = vunpack.c.h.b16 %v1198
        %v1380 = vunpack.c.l.b16 %v1199
        %v1381 = vunpack.c.h.b16 %v1199
        %v1382 = vunpack.c.l.b16 %v1200
        %v1383 = vunpack.c.h.b16 %v1200
        %v1384 = vunpack.c.l.b16 %v1201
        %v1385 = vunpack.c.h.b16 %v1201
        %v1386 = vunpack.c.l.b16 %v1202
        %v1387 = vunpack.c.h.b16 %v1202
        %v1388 = vunpack.c.l.b16 %v1203
        %v1389 = vunpack.c.h.b16 %v1203
        %v1390 = vunpack.c.l.b16 %v1204
        %v1391 = vunpack.c.h.b16 %v1204
        %v1392 = vunpack.c.l.b16 %v1205
        %v1393 = vunpack.c.h.b16 %v1205
        %v1394 = vunpack.c.l.b16 %v1206
        %v1395 = vunpack.c.h.b16 %v1206
        %v1396 = vunpack.c.l.b16 %v1207
        %v1397 = vunpack.c.h.b16 %v1207
        %v1398 = vunpack.c.l.b16 %v1208
        %v1399 = vunpack.c.h.b16 %v1208
        %v1400 = vunpack.c.l.b16 %v1209
        %v1401 = vunpack.c.h.b16 %v1209
        %v1402 = vpack.c.b16 %v1282, %v1274
        %v1403 = vpack.c.b16 %v1283, %v1275
        %v1404 = vpack.c.b16 %v1284, %v1276
        %v1405 = vpack.c.b16 %v1285, %v1277
        %v1406 = vpack.c.b16 %v1286, %v1278
        %v1407 = vpack.c.b16 %v1287, %v1279
        %v1408 = vpack.c.b16 %v1288, %v1280
        %v1409 = vpack.c.b16 %v1289, %v1281
        %v1410 = vpack.c.b16 %v1298, %v1290
        %v1411 = vpack.c.b16 %v1299, %v1291
        %v1412 = vpack.c.b16 %v1300, %v1292
        %v1413 = vpack.c.b16 %v1301, %v1293
        %v1414 = vpack.c.b16 %v1302, %v1294
        %v1415 = vpack.c.b16 %v1303, %v1295
        %v1416 = vpack.c.b16 %v1304, %v1296
        %v1417 = vpack.c.b16 %v1305, %v1297
        %v1418 = vpack.c.b16 %v1314, %v1306
        %v1419 = vpack.c.b16 %v1315, %v1307
        %v1420 = vpack.c.b16 %v1316, %v1308
        %v1421 = vpack.c.b16 %v1317, %v1309
        %v1422 = vpack.c.b16 %v1318, %v1310
        %v1423 = vpack.c.b16 %v1319, %v1311
        %v1424 = vpack.c.b16 %v1320, %v1312
        %v1425 = vpack.c.b16 %v1321, %v1313
        %v1426 = vpack.c.b16 %v1330, %v1322
        %v1427 = vpack.c.b16 %v1331, %v1323
        %v1428 = vpack.c.b16 %v1332, %v1324
        %v1429 = vpack.c.b16 %v1333, %v1325
        %v1430 = vpack.c.b16 %v1334, %v1326
        %v1431 = vpack.c.b16 %v1335, %v1327
        %v1432 = vpack.c.b16 %v1336, %v1328
        %v1433 = vpack.c.b16 %v1337, %v1329
        %v1434 = vpack.c.b16 %v1346, %v1338
        %v1435 = vpack.c.b16 %v1347, %v1339
        %v1436 = vpack.c.b16 %v1348, %v1340
        %v1437 = vpack.c.b16 %v1349, %v1341
        %v1438 = vpack.c.b16 %v1350, %v1342
        %v1439 = vpack.c.b16 %v1351, %v1343
        %v1440 = vpack.c.b16 %v1352, %v1344
        %v1441 = vpack.c.b16 %v1353, %v1345
        %v1442 = vpack.c.b16 %v1362, %v1354
        %v1443 = vpack.c.b16 %v1363, %v1355
        %v1444 = vpack.c.b16 %v1364, %v1356
        %v1445 = vpack.c.b16 %v1365, %v1357
        %v1446 = vpack.c.b16 %v1366, %v1358
        %v1447 = vpack.c.b16 %v1367, %v1359
        %v1448 = vpack.c.b16 %v1368, %v1360
        %v1449 = vpack.c.b16 %v1369, %v1361
        %v1450 = vpack.c.b16 %v1378, %v1370
        %v1451 = vpack.c.b16 %v1379, %v1371
        %v1452 = vpack.c.b16 %v1380, %v1372
        %v1453 = vpack.c.b16 %v1381, %v1373
        %v1454 = vpack.c.b16 %v1382, %v1374
        %v1455 = vpack.c.b16 %v1383, %v1375
        %v1456 = vpack.c.b16 %v1384, %v1376
        %v1457 = vpack.c.b16 %v1385, %v1377
        %v1458 = vpack.c.b16 %v1394, %v1386
        %v1459 = vpack.c.b16 %v1395, %v1387
        %v1460 = vpack.c.b16 %v1396, %v1388
        %v1461 = vpack.c.b16 %v1397, %v1389
        %v1462 = vpack.c.b16 %v1398, %v1390
        %v1463 = vpack.c.b16 %v1399, %v1391
        %v1464 = vpack.c.b16 %v1400, %v1392
        %v1465 = vpack.c.b16 %v1401, %v1393
        %1530 = vmatprep.subr.bf16.mxu0 %v1403
        %1531 = vmatpush1.bf16.msra.mxu0 %v1402
        %1532 = vmatprep.subr.bf16.mxu0 %v1411
        %1533 = vmatpush1.bf16.msra.mxu0 %v1410
        %1534 = vmatprep.subr.bf16.mxu0 %v1419
        %1535 = vmatpush1.bf16.msra.mxu0 %v1418
        %1536 = vmatprep.subr.bf16.mxu0 %v1427
        %1537 = vmatpush1.bf16.msra.mxu0 %v1426
        %1538 = vmatprep.subr.bf16.mxu0 %v1435
        %1539 = vmatpush1.bf16.msra.mxu0 %v1434
        %1540 = vmatprep.subr.bf16.mxu0 %v1443
        %1541 = vmatpush1.bf16.msra.mxu0 %v1442
        %1542 = vmatprep.subr.bf16.mxu0 %v1451
        %1543 = vmatpush1.bf16.msra.mxu0 %v1450
        %1544 = vmatprep.subr.bf16.mxu0 %v1459
        %1545 = vmatpush1.bf16.msra.mxu0 %v1458
        %1546 = vmatprep.subr.bf16.mxu0 0
        %1547 = vmatpush1.bf16.msra.mxu0 0
        %1548 = vmatprep.subr.bf16.mxu0 0
        %1549 = vmatpush1.bf16.msra.mxu0 0
        %1550 = vmatprep.subr.bf16.mxu0 0
        %1551 = vmatpush1.bf16.msra.mxu0 0
        %1552 = vmatprep.subr.bf16.mxu0 0
        %1553 = vmatpush1.bf16.msra.mxu0 0
        %1554 = vmatprep.subr.bf16.mxu0 0
        %1555 = vmatpush1.bf16.msra.mxu0 0
        %1556 = vmatprep.subr.bf16.mxu0 0
        %1557 = vmatpush1.bf16.msra.mxu0 0
        %1558 = vmatprep.subr.bf16.mxu0 0
        %1559 = vmatpush1.bf16.msra.mxu0 0
        %1560 = vmatprep.subr.bf16.mxu0 0
        %1561 = vmatpush1.bf16.msra.mxu0 0
        %1562 = vmatprep.mubr.bf16.mxu0 0
        %1563 = vmatmul.mubr.bf16.gmra.mrb[0].mxu0 %v526
        %v1564 = vpop.f32.mrb[0].mxu0
        %v1565 = vadd.f32 0.0, %v1564
        %v1566 = vpop.f32.mrb[0].mxu0
        %v1567 = vadd.f32 0.0, %v1566
        %v1568 = vpop.f32.mrb[0].mxu0
        %v1569 = vadd.f32 0.0, %v1568
        %v1570 = vpop.f32.mrb[0].mxu0
        %v1571 = vadd.f32 0.0, %v1570
        %1572 = vmatprep.mubr.bf16.mxu0 0
        %1573 = vmatmul.mubr.bf16.gmra.mrb[0].mxu0 %v527
        %v1574 = vpop.f32.mrb[0].mxu0
        %v1575 = vadd.f32 0.0, %v1574
        %v1576 = vpop.f32.mrb[0].mxu0
        %v1577 = vadd.f32 0.0, %v1576
        %v1578 = vpop.f32.mrb[0].mxu0
        %v1579 = vadd.f32 0.0, %v1578
        %v1580 = vpop.f32.mrb[0].mxu0
        %v1581 = vadd.f32 0.0, %v1580
        %1582 = vmatprep.mubr.bf16.mxu0 0
        %1583 = vmatmul.mubr.bf16.gmra.mrb[0].mxu0 %v528
        %v1584 = vpop.f32.mrb[0].mxu0
        %v1585 = vadd.f32 0.0, %v1584
        %v1586 = vpop.f32.mrb[0].mxu0
        %v1587 = vadd.f32 0.0, %v1586
        %v1588 = vpop.f32.mrb[0].mxu0
        %v1589 = vadd.f32 0.0, %v1588
        %v1590 = vpop.f32.mrb[0].mxu0
        %v1591 = vadd.f32 0.0, %v1590
        %1592 = vmatprep.mubr.bf16.mxu0 0
        %1593 = vmatmul.mubr.bf16.gmra.mrb[0].mxu0 %v529
        %v1594 = vpop.f32.mrb[0].mxu0
        %v1595 = vadd.f32 0.0, %v1594
        %v1596 = vpop.f32.mrb[0].mxu0
        %v1597 = vadd.f32 0.0, %v1596
        %v1598 = vpop.f32.mrb[0].mxu0
        %v1599 = vadd.f32 0.0, %v1598
        %v1600 = vpop.f32.mrb[0].mxu0
        %v1601 = vadd.f32 0.0, %v1600
        %1602 = vdwg.mxu0
        %1603 = vmatprep.subr.bf16.mxu0 %v1405
        %1604 = vmatpush1.bf16.msra.mxu0 %v1404
        %1605 = vmatprep.subr.bf16.mxu0 %v1413
        %1606 = vmatpush1.bf16.msra.mxu0 %v1412
        %1607 = vmatprep.subr.bf16.mxu0 %v1421
        %1608 = vmatpush1.bf16.msra.mxu0 %v1420
        %1609 = vmatprep.subr.bf16.mxu0 %v1429
        %1610 = vmatpush1.bf16.msra.mxu0 %v1428
        %1611 = vmatprep.subr.bf16.mxu0 %v1437
        %1612 = vmatpush1.bf16.msra.mxu0 %v1436
        %1613 = vmatprep.subr.bf16.mxu0 %v1445
        %1614 = vmatpush1.bf16.msra.mxu0 %v1444
        %1615 = vmatprep.subr.bf16.mxu0 %v1453
        %1616 = vmatpush1.bf16.msra.mxu0 %v1452
        %1617 = vmatprep.subr.bf16.mxu0 %v1461
        %1618 = vmatpush1.bf16.msra.mxu0 %v1460
        %1619 = vmatprep.subr.bf16.mxu0 0
        %1620 = vmatpush1.bf16.msra.mxu0 0
        %1621 = vmatprep.subr.bf16.mxu0 0
        %1622 = vmatpush1.bf16.msra.mxu0 0
        %1623 = vmatprep.subr.bf16.mxu0 0
        %1624 = vmatpush1.bf16.msra.mxu0 0
        %1625 = vmatprep.subr.bf16.mxu0 0
        %1626 = vmatpush1.bf16.msra.mxu0 0
        %1627 = vmatprep.subr.bf16.mxu0 0
        %1628 = vmatpush1.bf16.msra.mxu0 0
        %1629 = vmatprep.subr.bf16.mxu0 0
        %1630 = vmatpush1.bf16.msra.mxu0 0
        %1631 = vmatprep.subr.bf16.mxu0 0
        %1632 = vmatpush1.bf16.msra.mxu0 0
        %1633 = vmatprep.subr.bf16.mxu0 0
        %1634 = vmatpush1.bf16.msra.mxu0 0
        %1635 = vmatprep.mubr.bf16.mxu0 0
        %1636 = vmatmul.mubr.bf16.gmra.mrb[0].mxu0 %v526
        %v1637 = vpop.f32.mrb[0].mxu0
        %v1638 = vadd.f32 0.0, %v1637
        %v1639 = vpop.f32.mrb[0].mxu0
        %v1640 = vadd.f32 0.0, %v1639
        %v1641 = vpop.f32.mrb[0].mxu0
        %v1642 = vadd.f32 0.0, %v1641
        %v1643 = vpop.f32.mrb[0].mxu0
        %v1644 = vadd.f32 0.0, %v1643
        %1645 = vmatprep.mubr.bf16.mxu0 0
        %1646 = vmatmul.mubr.bf16.gmra.mrb[0].mxu0 %v527
        %v1647 = vpop.f32.mrb[0].mxu0
        %v1648 = vadd.f32 0.0, %v1647
        %v1649 = vpop.f32.mrb[0].mxu0
        %v1650 = vadd.f32 0.0, %v1649
        %v1651 = vpop.f32.mrb[0].mxu0
        %v1652 = vadd.f32 0.0, %v1651
        %v1653 = vpop.f32.mrb[0].mxu0
        %v1654 = vadd.f32 0.0, %v1653
        %1655 = vmatprep.mubr.bf16.mxu0 0
        %1656 = vmatmul.mubr.bf16.gmra.mrb[0].mxu0 %v528
        %v1657 = vpop.f32.mrb[0].mxu0
        %v1658 = vadd.f32 0.0, %v1657
        %v1659 = vpop.f32.mrb[0].mxu0
        %v1660 = vadd.f32 0.0, %v1659
        %v1661 = vpop.f32.mrb[0].mxu0
        %v1662 = vadd.f32 0.0, %v1661
        %v1663 = vpop.f32.mrb[0].mxu0
        %v1664 = vadd.f32 0.0, %v1663
        %1665 = vmatprep.mubr.bf16.mxu0 0
        %1666 = vmatmul.mubr.bf16.gmra.mrb[0].mxu0 %v529
        %v1667 = vpop.f32.mrb[0].mxu0
        %v1668 = vadd.f32 0.0, %v1667
        %v1669 = vpop.f32.mrb[0].mxu0
        %v1670 = vadd.f32 0.0, %v1669
        %v1671 = vpop.f32.mrb[0].mxu0
        %v1672 = vadd.f32 0.0, %v1671
        %v1673 = vpop.f32.mrb[0].mxu0
        %v1674 = vadd.f32 0.0, %v1673
        %1675 = vdwg.mxu0
        %1676 = vmatprep.subr.bf16.mxu0 %v1407
        %1677 = vmatpush1.bf16.msra.mxu0 %v1406
        %1678 = vmatprep.subr.bf16.mxu0 %v1415
        %1679 = vmatpush1.bf16.msra.mxu0 %v1414
        %1680 = vmatprep.subr.bf16.mxu0 %v1423
        %1681 = vmatpush1.bf16.msra.mxu0 %v1422
        %1682 = vmatprep.subr.bf16.mxu0 %v1431
        %1683 = vmatpush1.bf16.msra.mxu0 %v1430
        %1684 = vmatprep.subr.bf16.mxu0 %v1439
        %1685 = vmatpush1.bf16.msra.mxu0 %v1438
        %1686 = vmatprep.subr.bf16.mxu0 %v1447
        %1687 = vmatpush1.bf16.msra.mxu0 %v1446
        %1688 = vmatprep.subr.bf16.mxu0 %v1455
        %1689 = vmatpush1.bf16.msra.mxu0 %v1454
        %1690 = vmatprep.subr.bf16.mxu0 %v1463
        %1691 = vmatpush1.bf16.msra.mxu0 %v1462
        %1692 = vmatprep.subr.bf16.mxu0 0
        %1693 = vmatpush1.bf16.msra.mxu0 0
        %1694 = vmatprep.subr.bf16.mxu0 0
        %1695 = vmatpush1.bf16.msra.mxu0 0
        %1696 = vmatprep.subr.bf16.mxu0 0
        %1697 = vmatpush1.bf16.msra.mxu0 0
        %1698 = vmatprep.subr.bf16.mxu0 0
        %1699 = vmatpush1.bf16.msra.mxu0 0
        %1700 = vmatprep.subr.bf16.mxu0 0
        %1701 = vmatpush1.bf16.msra.mxu0 0
        %1702 = vmatprep.subr.bf16.mxu0 0
        %1703 = vmatpush1.bf16.msra.mxu0 0
        %1704 = vmatprep.subr.bf16.mxu0 0
        %1705 = vmatpush1.bf16.msra.mxu0 0
        %1706 = vmatprep.subr.bf16.mxu0 0
        %1707 = vmatpush1.bf16.msra.mxu0 0
        %1708 = vmatprep.mubr.bf16.mxu0 0
        %1709 = vmatmul.mubr.bf16.gmra.mrb[0].mxu0 %v526
        %v1710 = vpop.f32.mrb[0].mxu0
        %v1711 = vadd.f32 0.0, %v1710
        %v1712 = vpop.f32.mrb[0].mxu0
        %v1713 = vadd.f32 0.0, %v1712
        %v1714 = vpop.f32.mrb[0].mxu0
        %v1715 = vadd.f32 0.0, %v1714
        %v1716 = vpop.f32.mrb[0].mxu0
        %v1717 = vadd.f32 0.0, %v1716
        %1718 = vmatprep.mubr.bf16.mxu0 0
        %1719 = vmatmul.mubr.bf16.gmra.mrb[0].mxu0 %v527
        %v1720 = vpop.f32.mrb[0].mxu0
        %v1721 = vadd.f32 0.0, %v1720
        %v1722 = vpop.f32.mrb[0].mxu0
        %v1723 = vadd.f32 0.0, %v1722
        %v1724 = vpop.f32.mrb[0].mxu0
        %v1725 = vadd.f32 0.0, %v1724
        %v1726 = vpop.f32.mrb[0].mxu0
        %v1727 = vadd.f32 0.0, %v1726
        %1728 = vmatprep.mubr.bf16.mxu0 0
        %1729 = vmatmul.mubr.bf16.gmra.mrb[0].mxu0 %v528
        %v1730 = vpop.f32.mrb[0].mxu0
        %v1731 = vadd.f32 0.0, %v1730
        %v1732 = vpop.f32.mrb[0].mxu0
        %v1733 = vadd.f32 0.0, %v1732
        %v1734 = vpop.f32.mrb[0].mxu0
        %v1735 = vadd.f32 0.0, %v1734
        %v1736 = vpop.f32.mrb[0].mxu0
        %v1737 = vadd.f32 0.0, %v1736
        %1738 = vmatprep.mubr.bf16.mxu0 0
        %1739 = vmatmul.mubr.bf16.gmra.mrb[0].mxu0 %v529
        %v1740 = vpop.f32.mrb[0].mxu0
        %v1741 = vadd.f32 0.0, %v1740
        %v1742 = vpop.f32.mrb[0].mxu0
        %v1743 = vadd.f32 0.0, %v1742
        %v1744 = vpop.f32.mrb[0].mxu0
        %v1745 = vadd.f32 0.0, %v1744
        %v1746 = vpop.f32.mrb[0].mxu0
        %v1747 = vadd.f32 0.0, %v1746
        %1748 = vdwg.mxu0
        %1749 = vmatprep.subr.bf16.mxu0 %v1409
        %1750 = vmatpush1.bf16.msra.mxu0 %v1408
        %1751 = vmatprep.subr.bf16.mxu0 %v1417
        %1752 = vmatpush1.bf16.msra.mxu0 %v1416
        %1753 = vmatprep.subr.bf16.mxu0 %v1425
        %1754 = vmatpush1.bf16.msra.mxu0 %v1424
        %1755 = vmatprep.subr.bf16.mxu0 %v1433
        %1756 = vmatpush1.bf16.msra.mxu0 %v1432
        %1757 = vmatprep.subr.bf16.mxu0 %v1441
        %1758 = vmatpush1.bf16.msra.mxu0 %v1440
        %1759 = vmatprep.subr.bf16.mxu0 %v1449
        %1760 = vmatpush1.bf16.msra.mxu0 %v1448
        %1761 = vmatprep.subr.bf16.mxu0 %v1457
        %1762 = vmatpush1.bf16.msra.mxu0 %v1456
        %1763 = vmatprep.subr.bf16.mxu0 %v1465
        %1764 = vmatpush1.bf16.msra.mxu0 %v1464
        %1765 = vmatprep.subr.bf16.mxu0 0
        %1766 = vmatpush1.bf16.msra.mxu0 0
        %1767 = vmatprep.subr.bf16.mxu0 0
        %1768 = vmatpush1.bf16.msra.mxu0 0
        %1769 = vmatprep.subr.bf16.mxu0 0
        %1770 = vmatpush1.bf16.msra.mxu0 0
        %1771 = vmatprep.subr.bf16.mxu0 0
        %1772 = vmatpush1.bf16.msra.mxu0 0
        %1773 = vmatprep.subr.bf16.mxu0 0
        %1774 = vmatpush1.bf16.msra.mxu0 0
        %1775 = vmatprep.subr.bf16.mxu0 0
        %1776 = vmatpush1.bf16.msra.mxu0 0
        %1777 = vmatprep.subr.bf16.mxu0 0
        %1778 = vmatpush1.bf16.msra.mxu0 0
        %1779 = vmatprep.subr.bf16.mxu0 0
        %1780 = vmatpush1.bf16.msra.mxu0 0
        %1781 = vmatprep.mubr.bf16.mxu0 0
        %1782 = vmatmul.mubr.bf16.gmra.mrb[0].mxu0 %v526
        %v1783 = vpop.f32.mrb[0].mxu0
        %v1784 = vadd.f32 0.0, %v1783
        %v1785 = vpop.f32.mrb[0].mxu0
        %v1786 = vadd.f32 0.0, %v1785
        %v1787 = vpop.f32.mrb[0].mxu0
        %v1788 = vadd.f32 0.0, %v1787
        %v1789 = vpop.f32.mrb[0].mxu0
        %v1790 = vadd.f32 0.0, %v1789
        %1791 = vmatprep.mubr.bf16.mxu0 0
        %1792 = vmatmul.mubr.bf16.gmra.mrb[0].mxu0 %v527
        %v1793 = vpop.f32.mrb[0].mxu0
        %v1794 = vadd.f32 0.0, %v1793
        %v1795 = vpop.f32.mrb[0].mxu0
        %v1796 = vadd.f32 0.0, %v1795
        %v1797 = vpop.f32.mrb[0].mxu0
        %v1798 = vadd.f32 0.0, %v1797
        %v1799 = vpop.f32.mrb[0].mxu0
        %v1800 = vadd.f32 0.0, %v1799
        %1801 = vmatprep.mubr.bf16.mxu0 0
        %1802 = vmatmul.mubr.bf16.gmra.mrb[0].mxu0 %v528
        %v1803 = vpop.f32.mrb[0].mxu0
        %v1804 = vadd.f32 0.0, %v1803
        %v1805 = vpop.f32.mrb[0].mxu0
        %v1806 = vadd.f32 0.0, %v1805
        %v1807 = vpop.f32.mrb[0].mxu0
        %v1808 = vadd.f32 0.0, %v1807
        %v1809 = vpop.f32.mrb[0].mxu0
        %v1810 = vadd.f32 0.0, %v1809
        %1811 = vmatprep.mubr.bf16.mxu0 0
        %1812 = vmatmul.mubr.bf16.gmra.mrb[0].mxu0 %v529
        %v1813 = vpop.f32.mrb[0].mxu0
        %v1814 = vadd.f32 0.0, %v1813
        %v1815 = vpop.f32.mrb[0].mxu0
        %v1816 = vadd.f32 0.0, %v1815
        %v1817 = vpop.f32.mrb[0].mxu0
        %v1818 = vadd.f32 0.0, %v1817
        %v1819 = vpop.f32.mrb[0].mxu0
        %v1820 = vadd.f32 0.0, %v1819
        %1821 = vdwg.mxu0
        %v1822 = vsub.f32 0.0, %v889
        %v1823 = vsub.f32 0.0, %v891
        %v1824 = vsub.f32 0.0, %v962
        %v1825 = vsub.f32 0.0, %v964
        %v1826 = vsub.f32 0.0, %v1035
        %v1827 = vsub.f32 0.0, %v1037
        %v1828 = vsub.f32 0.0, %v1108
        %v1829 = vsub.f32 0.0, %v1110
        %v1830 = vsub.f32 0.0, %v893
        %v1831 = vsub.f32 0.0, %v895
        %v1832 = vsub.f32 0.0, %v966
        %v1833 = vsub.f32 0.0, %v968
        %v1834 = vsub.f32 0.0, %v1039
        %v1835 = vsub.f32 0.0, %v1041
        %v1836 = vsub.f32 0.0, %v1112
        %v1837 = vsub.f32 0.0, %v1114
        %v1838 = vsub.f32 0.0, %v899
        %v1839 = vsub.f32 0.0, %v901
        %v1840 = vsub.f32 0.0, %v972
        %v1841 = vsub.f32 0.0, %v974
        %v1842 = vsub.f32 0.0, %v1045
        %v1843 = vsub.f32 0.0, %v1047
        %v1844 = vsub.f32 0.0, %v1118
        %v1845 = vsub.f32 0.0, %v1120
        %v1846 = vsub.f32 0.0, %v903
        %v1847 = vsub.f32 0.0, %v905
        %v1848 = vsub.f32 0.0, %v976
        %v1849 = vsub.f32 0.0, %v978
        %v1850 = vsub.f32 0.0, %v1049
        %v1851 = vsub.f32 0.0, %v1051
        %v1852 = vsub.f32 0.0, %v1122
        %v1853 = vsub.f32 0.0, %v1124
        %v1854 = vsub.f32 0.0, %v909
        %v1855 = vsub.f32 0.0, %v911
        %v1856 = vsub.f32 0.0, %v982
        %v1857 = vsub.f32 0.0, %v984
        %v1858 = vsub.f32 0.0, %v1055
        %v1859 = vsub.f32 0.0, %v1057
        %v1860 = vsub.f32 0.0, %v1128
        %v1861 = vsub.f32 0.0, %v1130
        %v1862 = vsub.f32 0.0, %v913
        %v1863 = vsub.f32 0.0, %v915
        %v1864 = vsub.f32 0.0, %v986
        %v1865 = vsub.f32 0.0, %v988
        %v1866 = vsub.f32 0.0, %v1059
        %v1867 = vsub.f32 0.0, %v1061
        %v1868 = vsub.f32 0.0, %v1132
        %v1869 = vsub.f32 0.0, %v1134
        %v1870 = vsub.f32 0.0, %v919
        %v1871 = vsub.f32 0.0, %v921
        %v1872 = vsub.f32 0.0, %v992
        %v1873 = vsub.f32 0.0, %v994
        %v1874 = vsub.f32 0.0, %v1065
        %v1875 = vsub.f32 0.0, %v1067
        %v1876 = vsub.f32 0.0, %v1138
        %v1877 = vsub.f32 0.0, %v1140
        %v1878 = vsub.f32 0.0, %v923
        %v1879 = vsub.f32 0.0, %v925
        %v1880 = vsub.f32 0.0, %v996
        %v1881 = vsub.f32 0.0, %v998
        %v1882 = vsub.f32 0.0, %v1069
        %v1883 = vsub.f32 0.0, %v1071
        %v1884 = vsub.f32 0.0, %v1142
        %v1885 = vsub.f32 0.0, %v1144
        %v1886 = vmul.f32 %v1822, 1.442695
        %v1887 = vpow.pop %v1886
        %v1888 = vmul.f32 %v1823, 1.442695
        %v1889 = vpow.pop %v1888
        %v1890 = vmul.f32 %v1824, 1.442695
        %v1891 = vpow.pop %v1890
        %v1892 = vmul.f32 %v1825, 1.442695
        %v1893 = vpow.pop %v1892
        %v1894 = vmul.f32 %v1826, 1.442695
        %v1895 = vpow.pop %v1894
        %v1896 = vmul.f32 %v1827, 1.442695
        %v1897 = vpow.pop %v1896
        %v1898 = vmul.f32 %v1828, 1.442695
        %v1899 = vpow.pop %v1898
        %v1900 = vmul.f32 %v1829, 1.442695
        %v1901 = vpow.pop %v1900
        %v1902 = vmul.f32 %v1830, 1.442695
        %v1903 = vpow.pop %v1902
        %v1904 = vmul.f32 %v1831, 1.442695
        %v1905 = vpow.pop %v1904
        %v1906 = vmul.f32 %v1832, 1.442695
        %v1907 = vpow.pop %v1906
        %v1908 = vmul.f32 %v1833, 1.442695
        %v1909 = vpow.pop %v1908
        %v1910 = vmul.f32 %v1834, 1.442695
        %v1911 = vpow.pop %v1910
        %v1912 = vmul.f32 %v1835, 1.442695
        %v1913 = vpow.pop %v1912
        %v1914 = vmul.f32 %v1836, 1.442695
        %v1915 = vpow.pop %v1914
        %v1916 = vmul.f32 %v1837, 1.442695
        %v1917 = vpow.pop %v1916
        %v1918 = vmul.f32 %v1838, 1.442695
        %v1919 = vpow.pop %v1918
        %v1920 = vmul.f32 %v1839, 1.442695
        %v1921 = vpow.pop %v1920
        %v1922 = vmul.f32 %v1840, 1.442695
        %v1923 = vpow.pop %v1922
        %v1924 = vmul.f32 %v1841, 1.442695
        %v1925 = vpow.pop %v1924
        %v1926 = vmul.f32 %v1842, 1.442695
        %v1927 = vpow.pop %v1926
        %v1928 = vmul.f32 %v1843, 1.442695
        %v1929 = vpow.pop %v1928
        %v1930 = vmul.f32 %v1844, 1.442695
        %v1931 = vpow.pop %v1930
        %v1932 = vmul.f32 %v1845, 1.442695
        %v1933 = vpow.pop %v1932
        %v1934 = vmul.f32 %v1846, 1.442695
        %v1935 = vpow.pop %v1934
        %v1936 = vmul.f32 %v1847, 1.442695
        %v1937 = vpow.pop %v1936
        %v1938 = vmul.f32 %v1848, 1.442695
        %v1939 = vpow.pop %v1938
        %v1940 = vmul.f32 %v1849, 1.442695
        %v1941 = vpow.pop %v1940
        %v1942 = vmul.f32 %v1850, 1.442695
        %v1943 = vpow.pop %v1942
        %v1944 = vmul.f32 %v1851, 1.442695
        %v1945 = vpow.pop %v1944
        %v1946 = vmul.f32 %v1852, 1.442695
        %v1947 = vpow.pop %v1946
        %v1948 = vmul.f32 %v1853, 1.442695
        %v1949 = vpow.pop %v1948
        %v1950 = vmul.f32 %v1854, 1.442695
        %v1951 = vpow.pop %v1950
        %v1952 = vmul.f32 %v1855, 1.442695
        %v1953 = vpow.pop %v1952
        %v1954 = vmul.f32 %v1856, 1.442695
        %v1955 = vpow.pop %v1954
        %v1956 = vmul.f32 %v1857, 1.442695
        %v1957 = vpow.pop %v1956
        %v1958 = vmul.f32 %v1858, 1.442695
        %v1959 = vpow.pop %v1958
        %v1960 = vmul.f32 %v1859, 1.442695
        %v1961 = vpow.pop %v1960
        %v1962 = vmul.f32 %v1860, 1.442695
        %v1963 = vpow.pop %v1962
        %v1964 = vmul.f32 %v1861, 1.442695
        %v1965 = vpow.pop %v1964
        %v1966 = vmul.f32 %v1862, 1.442695
        %v1967 = vpow.pop %v1966
        %v1968 = vmul.f32 %v1863, 1.442695
        %v1969 = vpow.pop %v1968
        %v1970 = vmul.f32 %v1864, 1.442695
        %v1971 = vpow.pop %v1970
        %v1972 = vmul.f32 %v1865, 1.442695
        %v1973 = vpow.pop %v1972
        %v1974 = vmul.f32 %v1866, 1.442695
        %v1975 = vpow.pop %v1974
        %v1976 = vmul.f32 %v1867, 1.442695
        %v1977 = vpow.pop %v1976
        %v1978 = vmul.f32 %v1868, 1.442695
        %v1979 = vpow.pop %v1978
        %v1980 = vmul.f32 %v1869, 1.442695
        %v1981 = vpow.pop %v1980
        %v1982 = vmul.f32 %v1870, 1.442695
        %v1983 = vpow.pop %v1982
        %v1984 = vmul.f32 %v1871, 1.442695
        %v1985 = vpow.pop %v1984
        %v1986 = vmul.f32 %v1872, 1.442695
        %v1987 = vpow.pop %v1986
        %v1988 = vmul.f32 %v1873, 1.442695
        %v1989 = vpow.pop %v1988
        %v1990 = vmul.f32 %v1874, 1.442695
        %v1991 = vpow.pop %v1990
        %v1992 = vmul.f32 %v1875, 1.442695
        %v1993 = vpow.pop %v1992
        %v1994 = vmul.f32 %v1876, 1.442695
        %v1995 = vpow.pop %v1994
        %v1996 = vmul.f32 %v1877, 1.442695
        %v1997 = vpow.pop %v1996
        %v1998 = vmul.f32 %v1878, 1.442695
        %v1999 = vpow.pop %v1998
        %v2000 = vmul.f32 %v1879, 1.442695
        %v2001 = vpow.pop %v2000
        %v2002 = vmul.f32 %v1880, 1.442695
        %v2003 = vpow.pop %v2002
        %v2004 = vmul.f32 %v1881, 1.442695
        %v2005 = vpow.pop %v2004
        %v2006 = vmul.f32 %v1882, 1.442695
        %v2007 = vpow.pop %v2006
        %v2008 = vmul.f32 %v1883, 1.442695
        %v2009 = vpow.pop %v2008
        %v2010 = vmul.f32 %v1884, 1.442695
        %v2011 = vpow.pop %v2010
        %v2012 = vmul.f32 %v1885, 1.442695
        %v2013 = vpow.pop %v2012
        %v2014 = vadd.f32 %v1887, 1.0
        %v2015 = vadd.f32 %v1889, 1.0
        %v2016 = vadd.f32 %v1891, 1.0
        %v2017 = vadd.f32 %v1893, 1.0
        %v2018 = vadd.f32 %v1895, 1.0
        %v2019 = vadd.f32 %v1897, 1.0
        %v2020 = vadd.f32 %v1899, 1.0
        %v2021 = vadd.f32 %v1901, 1.0
        %v2022 = vadd.f32 %v1903, 1.0
        %v2023 = vadd.f32 %v1905, 1.0
        %v2024 = vadd.f32 %v1907, 1.0
        %v2025 = vadd.f32 %v1909, 1.0
        %v2026 = vadd.f32 %v1911, 1.0
        %v2027 = vadd.f32 %v1913, 1.0
        %v2028 = vadd.f32 %v1915, 1.0
        %v2029 = vadd.f32 %v1917, 1.0
        %v2030 = vadd.f32 %v1919, 1.0
        %v2031 = vadd.f32 %v1921, 1.0
        %v2032 = vadd.f32 %v1923, 1.0
        %v2033 = vadd.f32 %v1925, 1.0
        %v2034 = vadd.f32 %v1927, 1.0
        %v2035 = vadd.f32 %v1929, 1.0
        %v2036 = vadd.f32 %v1931, 1.0
        %v2037 = vadd.f32 %v1933, 1.0
        %v2038 = vadd.f32 %v1935, 1.0
        %v2039 = vadd.f32 %v1937, 1.0
        %v2040 = vadd.f32 %v1939, 1.0
        %v2041 = vadd.f32 %v1941, 1.0
        %v2042 = vadd.f32 %v1943, 1.0
        %v2043 = vadd.f32 %v1945, 1.0
        %v2044 = vadd.f32 %v1947, 1.0
        %v2045 = vadd.f32 %v1949, 1.0
        %v2046 = vadd.f32 %v1951, 1.0
        %v2047 = vadd.f32 %v1953, 1.0
        %v2048 = vadd.f32 %v1955, 1.0
        %v2049 = vadd.f32 %v1957, 1.0
        %v2050 = vadd.f32 %v1959, 1.0
        %v2051 = vadd.f32 %v1961, 1.0
        %v2052 = vadd.f32 %v1963, 1.0
        %v2053 = vadd.f32 %v1965, 1.0
        %v2054 = vadd.f32 %v1967, 1.0
        %v2055 = vadd.f32 %v1969, 1.0
        %v2056 = vadd.f32 %v1971, 1.0
        %v2057 = vadd.f32 %v1973, 1.0
        %v2058 = vadd.f32 %v1975, 1.0
        %v2059 = vadd.f32 %v1977, 1.0
        %v2060 = vadd.f32 %v1979, 1.0
        %v2061 = vadd.f32 %v1981, 1.0
        %v2062 = vadd.f32 %v1983, 1.0
        %v2063 = vadd.f32 %v1985, 1.0
        %v2064 = vadd.f32 %v1987, 1.0
        %v2065 = vadd.f32 %v1989, 1.0
        %v2066 = vadd.f32 %v1991, 1.0
        %v2067 = vadd.f32 %v1993, 1.0
        %v2068 = vadd.f32 %v1995, 1.0
        %v2069 = vadd.f32 %v1997, 1.0
        %v2070 = vadd.f32 %v1999, 1.0
        %v2071 = vadd.f32 %v2001, 1.0
        %v2072 = vadd.f32 %v2003, 1.0
        %v2073 = vadd.f32 %v2005, 1.0
        %v2074 = vadd.f32 %v2007, 1.0
        %v2075 = vadd.f32 %v2009, 1.0
        %v2076 = vadd.f32 %v2011, 1.0
        %v2077 = vadd.f32 %v2013, 1.0
        %v2078 = vrcp.pop %v2014
        %v2079 = vrcp.pop %v2015
        %v2080 = vrcp.pop %v2016
        %v2081 = vrcp.pop %v2017
        %v2082 = vrcp.pop %v2018
        %v2083 = vrcp.pop %v2019
        %v2084 = vrcp.pop %v2020
        %v2085 = vrcp.pop %v2021
        %v2086 = vrcp.pop %v2022
        %v2087 = vrcp.pop %v2023
        %v2088 = vrcp.pop %v2024
        %v2089 = vrcp.pop %v2025
        %v2090 = vrcp.pop %v2026
        %v2091 = vrcp.pop %v2027
        %v2092 = vrcp.pop %v2028
        %v2093 = vrcp.pop %v2029
        %v2094 = vrcp.pop %v2030
        %v2095 = vrcp.pop %v2031
        %v2096 = vrcp.pop %v2032
        %v2097 = vrcp.pop %v2033
        %v2098 = vrcp.pop %v2034
        %v2099 = vrcp.pop %v2035
        %v2100 = vrcp.pop %v2036
        %v2101 = vrcp.pop %v2037
        %v2102 = vrcp.pop %v2038
        %v2103 = vrcp.pop %v2039
        %v2104 = vrcp.pop %v2040
        %v2105 = vrcp.pop %v2041
        %v2106 = vrcp.pop %v2042
        %v2107 = vrcp.pop %v2043
        %v2108 = vrcp.pop %v2044
        %v2109 = vrcp.pop %v2045
        %v2110 = vrcp.pop %v2046
        %v2111 = vrcp.pop %v2047
        %v2112 = vrcp.pop %v2048
        %v2113 = vrcp.pop %v2049
        %v2114 = vrcp.pop %v2050
        %v2115 = vrcp.pop %v2051
        %v2116 = vrcp.pop %v2052
        %v2117 = vrcp.pop %v2053
        %v2118 = vrcp.pop %v2054
        %v2119 = vrcp.pop %v2055
        %v2120 = vrcp.pop %v2056
        %v2121 = vrcp.pop %v2057
        %v2122 = vrcp.pop %v2058
        %v2123 = vrcp.pop %v2059
        %v2124 = vrcp.pop %v2060
        %v2125 = vrcp.pop %v2061
        %v2126 = vrcp.pop %v2062
        %v2127 = vrcp.pop %v2063
        %v2128 = vrcp.pop %v2064
        %v2129 = vrcp.pop %v2065
        %v2130 = vrcp.pop %v2066
        %v2131 = vrcp.pop %v2067
        %v2132 = vrcp.pop %v2068
        %v2133 = vrcp.pop %v2069
        %v2134 = vrcp.pop %v2070
        %v2135 = vrcp.pop %v2071
        %v2136 = vrcp.pop %v2072
        %v2137 = vrcp.pop %v2073
        %v2138 = vrcp.pop %v2074
        %v2139 = vrcp.pop %v2075
        %v2140 = vrcp.pop %v2076
        %v2141 = vrcp.pop %v2077
        %v2142 = vmul.f32 %v889, %v2078
        %v2143 = vmul.f32 %v891, %v2079
        %v2144 = vmul.f32 %v962, %v2080
        %v2145 = vmul.f32 %v964, %v2081
        %v2146 = vmul.f32 %v1035, %v2082
        %v2147 = vmul.f32 %v1037, %v2083
        %v2148 = vmul.f32 %v1108, %v2084
        %v2149 = vmul.f32 %v1110, %v2085
        %v2150 = vmul.f32 %v893, %v2086
        %v2151 = vmul.f32 %v895, %v2087
        %v2152 = vmul.f32 %v966, %v2088
        %v2153 = vmul.f32 %v968, %v2089
        %v2154 = vmul.f32 %v1039, %v2090
        %v2155 = vmul.f32 %v1041, %v2091
        %v2156 = vmul.f32 %v1112, %v2092
        %v2157 = vmul.f32 %v1114, %v2093
        %v2158 = vmul.f32 %v899, %v2094
        %v2159 = vmul.f32 %v901, %v2095
        %v2160 = vmul.f32 %v972, %v2096
        %v2161 = vmul.f32 %v974, %v2097
        %v2162 = vmul.f32 %v1045, %v2098
        %v2163 = vmul.f32 %v1047, %v2099
        %v2164 = vmul.f32 %v1118, %v2100
        %v2165 = vmul.f32 %v1120, %v2101
        %v2166 = vmul.f32 %v903, %v2102
        %v2167 = vmul.f32 %v905, %v2103
        %v2168 = vmul.f32 %v976, %v2104
        %v2169 = vmul.f32 %v978, %v2105
        %v2170 = vmul.f32 %v1049, %v2106
        %v2171 = vmul.f32 %v1051, %v2107
        %v2172 = vmul.f32 %v1122, %v2108
        %v2173 = vmul.f32 %v1124, %v2109
        %v2174 = vmul.f32 %v909, %v2110
        %v2175 = vmul.f32 %v911, %v2111
        %v2176 = vmul.f32 %v982, %v2112
        %v2177 = vmul.f32 %v984, %v2113
        %v2178 = vmul.f32 %v1055, %v2114
        %v2179 = vmul.f32 %v1057, %v2115
        %v2180 = vmul.f32 %v1128, %v2116
        %v2181 = vmul.f32 %v1130, %v2117
        %v2182 = vmul.f32 %v913, %v2118
        %v2183 = vmul.f32 %v915, %v2119
        %v2184 = vmul.f32 %v986, %v2120
        %v2185 = vmul.f32 %v988, %v2121
        %v2186 = vmul.f32 %v1059, %v2122
        %v2187 = vmul.f32 %v1061, %v2123
        %v2188 = vmul.f32 %v1132, %v2124
        %v2189 = vmul.f32 %v1134, %v2125
        %v2190 = vmul.f32 %v919, %v2126
        %v2191 = vmul.f32 %v921, %v2127
        %v2192 = vmul.f32 %v992, %v2128
        %v2193 = vmul.f32 %v994, %v2129
        %v2194 = vmul.f32 %v1065, %v2130
        %v2195 = vmul.f32 %v1067, %v2131
        %v2196 = vmul.f32 %v1138, %v2132
        %v2197 = vmul.f32 %v1140, %v2133
        %v2198 = vmul.f32 %v923, %v2134
        %v2199 = vmul.f32 %v925, %v2135
        %v2200 = vmul.f32 %v996, %v2136
        %v2201 = vmul.f32 %v998, %v2137
        %v2202 = vmul.f32 %v1069, %v2138
        %v2203 = vmul.f32 %v1071, %v2139
        %v2204 = vmul.f32 %v1142, %v2140
        %v2205 = vmul.f32 %v1144, %v2141
        %v2206 = vmul.f32 %v2142, %v1565
        %v2207 = vmul.f32 %v2143, %v1567
        %v2208 = vmul.f32 %v2144, %v1638
        %v2209 = vmul.f32 %v2145, %v1640
        %v2210 = vmul.f32 %v2146, %v1711
        %v2211 = vmul.f32 %v2147, %v1713
        %v2212 = vmul.f32 %v2148, %v1784
        %v2213 = vmul.f32 %v2149, %v1786
        %v2214 = vmul.f32 %v2150, %v1569
        %v2215 = vmul.f32 %v2151, %v1571
        %v2216 = vmul.f32 %v2152, %v1642
        %v2217 = vmul.f32 %v2153, %v1644
        %v2218 = vmul.f32 %v2154, %v1715
        %v2219 = vmul.f32 %v2155, %v1717
        %v2220 = vmul.f32 %v2156, %v1788
        %v2221 = vmul.f32 %v2157, %v1790
        %v2222 = vmul.f32 %v2158, %v1575
        %v2223 = vmul.f32 %v2159, %v1577
        %v2224 = vmul.f32 %v2160, %v1648
        %v2225 = vmul.f32 %v2161, %v1650
        %v2226 = vmul.f32 %v2162, %v1721
        %v2227 = vmul.f32 %v2163, %v1723
        %v2228 = vmul.f32 %v2164, %v1794
        %v2229 = vmul.f32 %v2165, %v1796
        %v2230 = vmul.f32 %v2166, %v1579
        %v2231 = vmul.f32 %v2167, %v1581
        %v2232 = vmul.f32 %v2168, %v1652
        %v2233 = vmul.f32 %v2169, %v1654
        %v2234 = vmul.f32 %v2170, %v1725
        %v2235 = vmul.f32 %v2171, %v1727
        %v2236 = vmul.f32 %v2172, %v1798
        %v2237 = vmul.f32 %v2173, %v1800
        %v2238 = vmul.f32 %v2174, %v1585
        %v2239 = vmul.f32 %v2175, %v1587
        %v2240 = vmul.f32 %v2176, %v1658
        %v2241 = vmul.f32 %v2177, %v1660
        %v2242 = vmul.f32 %v2178, %v1731
        %v2243 = vmul.f32 %v2179, %v1733
        %v2244 = vmul.f32 %v2180, %v1804
        %v2245 = vmul.f32 %v2181, %v1806
        %v2246 = vmul.f32 %v2182, %v1589
        %v2247 = vmul.f32 %v2183, %v1591
        %v2248 = vmul.f32 %v2184, %v1662
        %v2249 = vmul.f32 %v2185, %v1664
        %v2250 = vmul.f32 %v2186, %v1735
        %v2251 = vmul.f32 %v2187, %v1737
        %v2252 = vmul.f32 %v2188, %v1808
        %v2253 = vmul.f32 %v2189, %v1810
        %v2254 = vmul.f32 %v2190, %v1595
        %v2255 = vmul.f32 %v2191, %v1597
        %v2256 = vmul.f32 %v2192, %v1668
        %v2257 = vmul.f32 %v2193, %v1670
        %v2258 = vmul.f32 %v2194, %v1741
        %v2259 = vmul.f32 %v2195, %v1743
        %v2260 = vmul.f32 %v2196, %v1814
        %v2261 = vmul.f32 %v2197, %v1816
        %v2262 = vmul.f32 %v2198, %v1599
        %v2263 = vmul.f32 %v2199, %v1601
        %v2264 = vmul.f32 %v2200, %v1672
        %v2265 = vmul.f32 %v2201, %v1674
        %v2266 = vmul.f32 %v2202, %v1745
        %v2267 = vmul.f32 %v2203, %v1747
        %v2268 = vmul.f32 %v2204, %v1818
        %v2269 = vmul.f32 %v2205, %v1820
        %v2270 = vld [vmem:[#allocation2] sm:$0xff]
        %v2271 = vld [vmem:[#allocation2 + $0x8] sm:$0xff]
        %v2272 = vld [vmem:[#allocation2 + $0x10] sm:$0xff]
        %v2273 = vld [vmem:[#allocation2 + $0x18] sm:$0xff]
        %v2274 = vld [vmem:[#allocation2 + $0x20] sm:$0xff]
        %v2275 = vld [vmem:[#allocation2 + $0x28] sm:$0xff]
        %v2276 = vld [vmem:[#allocation2 + $0x30] sm:$0xff]
        %v2277 = vld [vmem:[#allocation2 + $0x38] sm:$0xff]
        %v2278 = vpack.c.bf16 %v2214, %v2206
        %v2279 = vpack.c.bf16 %v2215, %v2207
        %v2280 = vpack.c.bf16 %v2216, %v2208
        %v2281 = vpack.c.bf16 %v2217, %v2209
        %v2282 = vpack.c.bf16 %v2218, %v2210
        %v2283 = vpack.c.bf16 %v2219, %v2211
        %v2284 = vpack.c.bf16 %v2220, %v2212
        %v2285 = vpack.c.bf16 %v2221, %v2213
        %v2286 = vpack.c.bf16 %v2230, %v2222
        %v2287 = vpack.c.bf16 %v2231, %v2223
        %v2288 = vpack.c.bf16 %v2232, %v2224
        %v2289 = vpack.c.bf16 %v2233, %v2225
        %v2290 = vpack.c.bf16 %v2234, %v2226
        %v2291 = vpack.c.bf16 %v2235, %v2227
        %v2292 = vpack.c.bf16 %v2236, %v2228
        %v2293 = vpack.c.bf16 %v2237, %v2229
        %v2294 = vpack.c.bf16 %v2246, %v2238
        %v2295 = vpack.c.bf16 %v2247, %v2239
        %v2296 = vpack.c.bf16 %v2248, %v2240
        %v2297 = vpack.c.bf16 %v2249, %v2241
        %v2298 = vpack.c.bf16 %v2250, %v2242
        %v2299 = vpack.c.bf16 %v2251, %v2243
        %v2300 = vpack.c.bf16 %v2252, %v2244
        %v2301 = vpack.c.bf16 %v2253, %v2245
        %v2302 = vpack.c.bf16 %v2262, %v2254
        %v2303 = vpack.c.bf16 %v2263, %v2255
        %v2304 = vpack.c.bf16 %v2264, %v2256
        %v2305 = vpack.c.bf16 %v2265, %v2257
        %v2306 = vpack.c.bf16 %v2266, %v2258
        %v2307 = vpack.c.bf16 %v2267, %v2259
        %v2308 = vpack.c.bf16 %v2268, %v2260
        %v2309 = vpack.c.bf16 %v2269, %v2261
        %v2310 = vld [vmem:[#allocation11] sm:$0xf]
        %v2311 = vld [vmem:[#allocation11 + $0x4] sm:$0xf]
        %v2312 = vld [vmem:[#allocation11 + $0x8] sm:$0xf]
        %v2313 = vld [vmem:[#allocation11 + $0xc] sm:$0xf]
        %v2314 = vld [vmem:[#allocation11 + $0x10] sm:$0xf]
        %v2315 = vld [vmem:[#allocation11 + $0x14] sm:$0xf]
        %v2316 = vld [vmem:[#allocation11 + $0x18] sm:$0xf]
        %v2317 = vld [vmem:[#allocation11 + $0x1c] sm:$0xf]
        %v2318 = vld [vmem:[#allocation11 + $0x20] sm:$0xf]
        %v2319 = vld [vmem:[#allocation11 + $0x24] sm:$0xf]
        %v2320 = vld [vmem:[#allocation11 + $0x28] sm:$0xf]
        %v2321 = vld [vmem:[#allocation11 + $0x2c] sm:$0xf]
        %v2322 = vld [vmem:[#allocation11 + $0x30] sm:$0xf]
        %v2323 = vld [vmem:[#allocation11 + $0x34] sm:$0xf]
        %v2324 = vld [vmem:[#allocation11 + $0x38] sm:$0xf]
        %v2325 = vld [vmem:[#allocation11 + $0x3c] sm:$0xf]
        %v2326 = vld [vmem:[#allocation11 + $0x40] sm:$0xf]
        %v2327 = vld [vmem:[#allocation11 + $0x44] sm:$0xf]
        %v2328 = vld [vmem:[#allocation11 + $0x48] sm:$0xf]
        %v2329 = vld [vmem:[#allocation11 + $0x4c] sm:$0xf]
        %v2330 = vld [vmem:[#allocation11 + $0x50] sm:$0xf]
        %v2331 = vld [vmem:[#allocation11 + $0x54] sm:$0xf]
        %v2332 = vld [vmem:[#allocation11 + $0x58] sm:$0xf]
        %v2333 = vld [vmem:[#allocation11 + $0x5c] sm:$0xf]
        %v2334 = vld [vmem:[#allocation11 + $0x60] sm:$0xf]
        %v2335 = vld [vmem:[#allocation11 + $0x64] sm:$0xf]
        %v2336 = vld [vmem:[#allocation11 + $0x68] sm:$0xf]
        %v2337 = vld [vmem:[#allocation11 + $0x6c] sm:$0xf]
        %v2338 = vld [vmem:[#allocation11 + $0x70] sm:$0xf]
        %v2339 = vld [vmem:[#allocation11 + $0x74] sm:$0xf]
        %v2340 = vld [vmem:[#allocation11 + $0x78] sm:$0xf]
        %v2341 = vld [vmem:[#allocation11 + $0x7c] sm:$0xf]
        %v2342 = vld [vmem:[#allocation11 + $0x80] sm:$0xf]
        %v2343 = vld [vmem:[#allocation11 + $0x84] sm:$0xf]
        %v2344 = vld [vmem:[#allocation11 + $0x88] sm:$0xf]
        %v2345 = vld [vmem:[#allocation11 + $0x8c] sm:$0xf]
        %v2346 = vld [vmem:[#allocation11 + $0x90] sm:$0xf]
        %v2347 = vld [vmem:[#allocation11 + $0x94] sm:$0xf]
        %v2348 = vld [vmem:[#allocation11 + $0x98] sm:$0xf]
        %v2349 = vld [vmem:[#allocation11 + $0x9c] sm:$0xf]
        %v2350 = vld [vmem:[#allocation11 + $0xa0] sm:$0xf]
        %v2351 = vld [vmem:[#allocation11 + $0xa4] sm:$0xf]
        %v2352 = vld [vmem:[#allocation11 + $0xa8] sm:$0xf]
        %v2353 = vld [vmem:[#allocation11 + $0xac] sm:$0xf]
        %v2354 = vld [vmem:[#allocation11 + $0xb0] sm:$0xf]
        %v2355 = vld [vmem:[#allocation11 + $0xb4] sm:$0xf]
        %v2356 = vld [vmem:[#allocation11 + $0xb8] sm:$0xf]
        %v2357 = vld [vmem:[#allocation11 + $0xbc] sm:$0xf]
        %v2358 = vld [vmem:[#allocation11 + $0xc0] sm:$0xf]
        %v2359 = vld [vmem:[#allocation11 + $0xc4] sm:$0xf]
        %v2360 = vld [vmem:[#allocation11 + $0xc8] sm:$0xf]
        %v2361 = vld [vmem:[#allocation11 + $0xcc] sm:$0xf]
        %v2362 = vld [vmem:[#allocation11 + $0xd0] sm:$0xf]
        %v2363 = vld [vmem:[#allocation11 + $0xd4] sm:$0xf]
        %v2364 = vld [vmem:[#allocation11 + $0xd8] sm:$0xf]
        %v2365 = vld [vmem:[#allocation11 + $0xdc] sm:$0xf]
        %v2366 = vld [vmem:[#allocation11 + $0xe0] sm:$0xf]
        %v2367 = vld [vmem:[#allocation11 + $0xe4] sm:$0xf]
        %v2368 = vld [vmem:[#allocation11 + $0xe8] sm:$0xf]
        %v2369 = vld [vmem:[#allocation11 + $0xec] sm:$0xf]
        %v2370 = vld [vmem:[#allocation11 + $0xf0] sm:$0xf]
        %v2371 = vld [vmem:[#allocation11 + $0xf4] sm:$0xf]
        %v2372 = vld [vmem:[#allocation11 + $0xf8] sm:$0xf]
        %v2373 = vld [vmem:[#allocation11 + $0xfc] sm:$0xf]
        %v2374 = vld [vmem:[#allocation11 + $0x100] sm:$0xf]
        %v2375 = vld [vmem:[#allocation11 + $0x104] sm:$0xf]
        %v2376 = vld [vmem:[#allocation11 + $0x108] sm:$0xf]
        %v2377 = vld [vmem:[#allocation11 + $0x10c] sm:$0xf]
        %v2378 = vld [vmem:[#allocation11 + $0x110] sm:$0xf]
        %v2379 = vld [vmem:[#allocation11 + $0x114] sm:$0xf]
        %v2380 = vld [vmem:[#allocation11 + $0x118] sm:$0xf]
        %v2381 = vld [vmem:[#allocation11 + $0x11c] sm:$0xf]
        %v2382 = vld [vmem:[#allocation11 + $0x120] sm:$0xf]
        %v2383 = vld [vmem:[#allocation11 + $0x124] sm:$0xf]
        %v2384 = vld [vmem:[#allocation11 + $0x128] sm:$0xf]
        %v2385 = vld [vmem:[#allocation11 + $0x12c] sm:$0xf]
        %v2386 = vld [vmem:[#allocation11 + $0x130] sm:$0xf]
        %v2387 = vld [vmem:[#allocation11 + $0x134] sm:$0xf]
        %v2388 = vld [vmem:[#allocation11 + $0x138] sm:$0xf]
        %v2389 = vld [vmem:[#allocation11 + $0x13c] sm:$0xf]
        %v2390 = vld [vmem:[#allocation11 + $0x140] sm:$0xf]
        %v2391 = vld [vmem:[#allocation11 + $0x144] sm:$0xf]
        %v2392 = vld [vmem:[#allocation11 + $0x148] sm:$0xf]
        %v2393 = vld [vmem:[#allocation11 + $0x14c] sm:$0xf]
        %v2394 = vld [vmem:[#allocation11 + $0x150] sm:$0xf]
        %v2395 = vld [vmem:[#allocation11 + $0x154] sm:$0xf]
        %v2396 = vld [vmem:[#allocation11 + $0x158] sm:$0xf]
        %v2397 = vld [vmem:[#allocation11 + $0x15c] sm:$0xf]
        %v2398 = vld [vmem:[#allocation11 + $0x160] sm:$0xf]
        %v2399 = vld [vmem:[#allocation11 + $0x164] sm:$0xf]
        %v2400 = vld [vmem:[#allocation11 + $0x168] sm:$0xf]
        %v2401 = vld [vmem:[#allocation11 + $0x16c] sm:$0xf]
        %v2402 = vld [vmem:[#allocation11 + $0x170] sm:$0xf]
        %v2403 = vld [vmem:[#allocation11 + $0x174] sm:$0xf]
        %v2404 = vld [vmem:[#allocation11 + $0x178] sm:$0xf]
        %v2405 = vld [vmem:[#allocation11 + $0x17c] sm:$0xf]
        %v2406 = vld [vmem:[#allocation11 + $0x180] sm:$0xf]
        %v2407 = vld [vmem:[#allocation11 + $0x184] sm:$0xf]
        %v2408 = vld [vmem:[#allocation11 + $0x188] sm:$0xf]
        %v2409 = vld [vmem:[#allocation11 + $0x18c] sm:$0xf]
        %v2410 = vld [vmem:[#allocation11 + $0x190] sm:$0xf]
        %v2411 = vld [vmem:[#allocation11 + $0x194] sm:$0xf]
        %v2412 = vld [vmem:[#allocation11 + $0x198] sm:$0xf]
        %v2413 = vld [vmem:[#allocation11 + $0x19c] sm:$0xf]
        %v2414 = vld [vmem:[#allocation11 + $0x1a0] sm:$0xf]
        %v2415 = vld [vmem:[#allocation11 + $0x1a4] sm:$0xf]
        %v2416 = vld [vmem:[#allocation11 + $0x1a8] sm:$0xf]
        %v2417 = vld [vmem:[#allocation11 + $0x1ac] sm:$0xf]
        %v2418 = vld [vmem:[#allocation11 + $0x1b0] sm:$0xf]
        %v2419 = vld [vmem:[#allocation11 + $0x1b4] sm:$0xf]
        %v2420 = vld [vmem:[#allocation11 + $0x1b8] sm:$0xf]
        %v2421 = vld [vmem:[#allocation11 + $0x1bc] sm:$0xf]
        %v2422 = vld [vmem:[#allocation11 + $0x1c0] sm:$0xf]
        %v2423 = vld [vmem:[#allocation11 + $0x1c4] sm:$0xf]
        %v2424 = vld [vmem:[#allocation11 + $0x1c8] sm:$0xf]
        %v2425 = vld [vmem:[#allocation11 + $0x1cc] sm:$0xf]
        %v2426 = vld [vmem:[#allocation11 + $0x1d0] sm:$0xf]
        %v2427 = vld [vmem:[#allocation11 + $0x1d4] sm:$0xf]
        %v2428 = vld [vmem:[#allocation11 + $0x1d8] sm:$0xf]
        %v2429 = vld [vmem:[#allocation11 + $0x1dc] sm:$0xf]
        %v2430 = vld [vmem:[#allocation11 + $0x1e0] sm:$0xf]
        %v2431 = vld [vmem:[#allocation11 + $0x1e4] sm:$0xf]
        %v2432 = vld [vmem:[#allocation11 + $0x1e8] sm:$0xf]
        %v2433 = vld [vmem:[#allocation11 + $0x1ec] sm:$0xf]
        %v2434 = vld [vmem:[#allocation11 + $0x1f0] sm:$0xf]
        %v2435 = vld [vmem:[#allocation11 + $0x1f4] sm:$0xf]
        %v2436 = vld [vmem:[#allocation11 + $0x1f8] sm:$0xf]
        %v2437 = vld [vmem:[#allocation11 + $0x1fc] sm:$0xf]
        %v2566 = vunpack.c.l.b16 %v2310
        %v2567 = vunpack.c.l.b16 %v2311
        %v2568 = vunpack.c.l.b16 %v2312
        %v2569 = vunpack.c.l.b16 %v2313
        %v2570 = vunpack.c.l.b16 %v2314
        %v2571 = vunpack.c.l.b16 %v2315
        %v2572 = vunpack.c.l.b16 %v2316
        %v2573 = vunpack.c.l.b16 %v2317
        %v2574 = vunpack.c.l.b16 %v2318
        %v2575 = vunpack.c.l.b16 %v2319
        %v2576 = vunpack.c.l.b16 %v2320
        %v2577 = vunpack.c.l.b16 %v2321
        %v2578 = vunpack.c.l.b16 %v2322
        %v2579 = vunpack.c.l.b16 %v2323
        %v2580 = vunpack.c.l.b16 %v2324
        %v2581 = vunpack.c.l.b16 %v2325
        %v2582 = vunpack.c.l.b16 %v2326
        %v2583 = vunpack.c.l.b16 %v2327
        %v2584 = vunpack.c.l.b16 %v2328
        %v2585 = vunpack.c.l.b16 %v2329
        %v2586 = vunpack.c.l.b16 %v2330
        %v2587 = vunpack.c.l.b16 %v2331
        %v2588 = vunpack.c.l.b16 %v2332
        %v2589 = vunpack.c.l.b16 %v2333
        %v2590 = vunpack.c.l.b16 %v2334
        %v2591 = vunpack.c.l.b16 %v2335
        %v2592 = vunpack.c.l.b16 %v2336
        %v2593 = vunpack.c.l.b16 %v2337
        %v2594 = vunpack.c.l.b16 %v2338
        %v2595 = vunpack.c.l.b16 %v2339
        %v2596 = vunpack.c.l.b16 %v2340
        %v2597 = vunpack.c.l.b16 %v2341
        %v2598 = vunpack.c.l.b16 %v2342
        %v2599 = vunpack.c.l.b16 %v2343
        %v2600 = vunpack.c.l.b16 %v2344
        %v2601 = vunpack.c.l.b16 %v2345
        %v2602 = vunpack.c.l.b16 %v2346
        %v2603 = vunpack.c.l.b16 %v2347
        %v2604 = vunpack.c.l.b16 %v2348
        %v2605 = vunpack.c.l.b16 %v2349
        %v2606 = vunpack.c.l.b16 %v2350
        %v2607 = vunpack.c.l.b16 %v2351
        %v2608 = vunpack.c.l.b16 %v2352
        %v2609 = vunpack.c.l.b16 %v2353
        %v2610 = vunpack.c.l.b16 %v2354
        %v2611 = vunpack.c.l.b16 %v2355
        %v2612 = vunpack.c.l.b16 %v2356
        %v2613 = vunpack.c.l.b16 %v2357
        %v2614 = vunpack.c.l.b16 %v2358
        %v2615 = vunpack.c.l.b16 %v2359
        %v2616 = vunpack.c.l.b16 %v2360
        %v2617 = vunpack.c.l.b16 %v2361
        %v2618 = vunpack.c.l.b16 %v2362
        %v2619 = vunpack.c.l.b16 %v2363
        %v2620 = vunpack.c.l.b16 %v2364
        %v2621 = vunpack.c.l.b16 %v2365
        %v2622 = vunpack.c.l.b16 %v2366
        %v2623 = vunpack.c.l.b16 %v2367
        %v2624 = vunpack.c.l.b16 %v2368
        %v2625 = vunpack.c.l.b16 %v2369
        %v2626 = vunpack.c.l.b16 %v2370
        %v2627 = vunpack.c.l.b16 %v2371
        %v2628 = vunpack.c.l.b16 %v2372
        %v2629 = vunpack.c.l.b16 %v2373
        %v2630 = vunpack.c.l.b16 %v2374
        %v2631 = vunpack.c.l.b16 %v2375
        %v2632 = vunpack.c.l.b16 %v2376
        %v2633 = vunpack.c.l.b16 %v2377
        %v2634 = vunpack.c.l.b16 %v2378
        %v2635 = vunpack.c.l.b16 %v2379
        %v2636 = vunpack.c.l.b16 %v2380
        %v2637 = vunpack.c.l.b16 %v2381
        %v2638 = vunpack.c.l.b16 %v2382
        %v2639 = vunpack.c.l.b16 %v2383
        %v2640 = vunpack.c.l.b16 %v2384
        %v2641 = vunpack.c.l.b16 %v2385
        %v2642 = vunpack.c.l.b16 %v2386
        %v2643 = vunpack.c.l.b16 %v2387
        %v2644 = vunpack.c.l.b16 %v2388
        %v2645 = vunpack.c.l.b16 %v2389
        %v2646 = vunpack.c.l.b16 %v2390
        %v2647 = vunpack.c.l.b16 %v2391
        %v2648 = vunpack.c.l.b16 %v2392
        %v2649 = vunpack.c.l.b16 %v2393
        %v2650 = vunpack.c.l.b16 %v2394
        %v2651 = vunpack.c.l.b16 %v2395
        %v2652 = vunpack.c.l.b16 %v2396
        %v2653 = vunpack.c.l.b16 %v2397
        %v2654 = vunpack.c.l.b16 %v2398
        %v2655 = vunpack.c.l.b16 %v2399
        %v2656 = vunpack.c.l.b16 %v2400
        %v2657 = vunpack.c.l.b16 %v2401
        %v2658 = vunpack.c.l.b16 %v2402
        %v2659 = vunpack.c.l.b16 %v2403
        %v2660 = vunpack.c.l.b16 %v2404
        %v2661 = vunpack.c.l.b16 %v2405
        %v2662 = vunpack.c.l.b16 %v2406
        %v2663 = vunpack.c.l.b16 %v2407
        %v2664 = vunpack.c.l.b16 %v2408
        %v2665 = vunpack.c.l.b16 %v2409
        %v2666 = vunpack.c.l.b16 %v2410
        %v2667 = vunpack.c.l.b16 %v2411
        %v2668 = vunpack.c.l.b16 %v2412
        %v2669 = vunpack.c.l.b16 %v2413
        %v2670 = vunpack.c.l.b16 %v2414
        %v2671 = vunpack.c.l.b16 %v2415
        %v2672 = vunpack.c.l.b16 %v2416
        %v2673 = vunpack.c.l.b16 %v2417
        %v2674 = vunpack.c.l.b16 %v2418
        %v2675 = vunpack.c.l.b16 %v2419
        %v2676 = vunpack.c.l.b16 %v2420
        %v2677 = vunpack.c.l.b16 %v2421
        %v2678 = vunpack.c.l.b16 %v2422
        %v2679 = vunpack.c.l.b16 %v2423
        %v2680 = vunpack.c.l.b16 %v2424
        %v2681 = vunpack.c.l.b16 %v2425
        %v2682 = vunpack.c.l.b16 %v2426
        %v2683 = vunpack.c.l.b16 %v2427
        %v2684 = vunpack.c.l.b16 %v2428
        %v2685 = vunpack.c.l.b16 %v2429
        %v2686 = vunpack.c.l.b16 %v2430
        %v2687 = vunpack.c.l.b16 %v2431
        %v2688 = vunpack.c.l.b16 %v2432
        %v2689 = vunpack.c.l.b16 %v2433
        %v2690 = vunpack.c.l.b16 %v2434
        %v2691 = vunpack.c.l.b16 %v2435
        %v2692 = vunpack.c.l.b16 %v2436
        %v2693 = vunpack.c.l.b16 %v2437
        %v2694 = vpack.c.b16 %v2567, %v2566
        %v2695 = vpack.c.b16 %v2569, %v2568
        %v2696 = vpack.c.b16 %v2571, %v2570
        %v2697 = vpack.c.b16 %v2573, %v2572
        %v2698 = vpack.c.b16 %v2575, %v2574
        %v2699 = vpack.c.b16 %v2577, %v2576
        %v2700 = vpack.c.b16 %v2579, %v2578
        %v2701 = vpack.c.b16 %v2581, %v2580
        %v2702 = vpack.c.b16 %v2583, %v2582
        %v2703 = vpack.c.b16 %v2585, %v2584
        %v2704 = vpack.c.b16 %v2587, %v2586
        %v2705 = vpack.c.b16 %v2589, %v2588
        %v2706 = vpack.c.b16 %v2591, %v2590
        %v2707 = vpack.c.b16 %v2593, %v2592
        %v2708 = vpack.c.b16 %v2595, %v2594
        %v2709 = vpack.c.b16 %v2597, %v2596
        %v2710 = vpack.c.b16 %v2599, %v2598
        %v2711 = vpack.c.b16 %v2601, %v2600
        %v2712 = vpack.c.b16 %v2603, %v2602
        %v2713 = vpack.c.b16 %v2605, %v2604
        %v2714 = vpack.c.b16 %v2607, %v2606
        %v2715 = vpack.c.b16 %v2609, %v2608
        %v2716 = vpack.c.b16 %v2611, %v2610
        %v2717 = vpack.c.b16 %v2613, %v2612
        %v2718 = vpack.c.b16 %v2615, %v2614
        %v2719 = vpack.c.b16 %v2617, %v2616
        %v2720 = vpack.c.b16 %v2619, %v2618
        %v2721 = vpack.c.b16 %v2621, %v2620
        %v2722 = vpack.c.b16 %v2623, %v2622
        %v2723 = vpack.c.b16 %v2625, %v2624
        %v2724 = vpack.c.b16 %v2627, %v2626
        %v2725 = vpack.c.b16 %v2629, %v2628
        %v2726 = vpack.c.b16 %v2631, %v2630
        %v2727 = vpack.c.b16 %v2633, %v2632
        %v2728 = vpack.c.b16 %v2635, %v2634
        %v2729 = vpack.c.b16 %v2637, %v2636
        %v2730 = vpack.c.b16 %v2639, %v2638
        %v2731 = vpack.c.b16 %v2641, %v2640
        %v2732 = vpack.c.b16 %v2643, %v2642
        %v2733 = vpack.c.b16 %v2645, %v2644
        %v2734 = vpack.c.b16 %v2647, %v2646
        %v2735 = vpack.c.b16 %v2649, %v2648
        %v2736 = vpack.c.b16 %v2651, %v2650
        %v2737 = vpack.c.b16 %v2653, %v2652
        %v2738 = vpack.c.b16 %v2655, %v2654
        %v2739 = vpack.c.b16 %v2657, %v2656
        %v2740 = vpack.c.b16 %v2659, %v2658
        %v2741 = vpack.c.b16 %v2661, %v2660
        %v2742 = vpack.c.b16 %v2663, %v2662
        %v2743 = vpack.c.b16 %v2665, %v2664
        %v2744 = vpack.c.b16 %v2667, %v2666
        %v2745 = vpack.c.b16 %v2669, %v2668
        %v2746 = vpack.c.b16 %v2671, %v2670
        %v2747 = vpack.c.b16 %v2673, %v2672
        %v2748 = vpack.c.b16 %v2675, %v2674
        %v2749 = vpack.c.b16 %v2677, %v2676
        %v2750 = vpack.c.b16 %v2679, %v2678
        %v2751 = vpack.c.b16 %v2681, %v2680
        %v2752 = vpack.c.b16 %v2683, %v2682
        %v2753 = vpack.c.b16 %v2685, %v2684
        %v2754 = vpack.c.b16 %v2687, %v2686
        %v2755 = vpack.c.b16 %v2689, %v2688
        %v2756 = vpack.c.b16 %v2691, %v2690
        %v2757 = vpack.c.b16 %v2693, %v2692
        %2822 = vmatprep.subr.bf16.mxu0 0
        %2823 = vmatpush1.bf16.msra.mxu0 %v2694
        %2824 = vmatprep.subr.bf16.mxu0 0
        %2825 = vmatpush1.bf16.msra.mxu0 %v2695
        %2826 = vmatprep.subr.bf16.mxu0 0
        %2827 = vmatpush1.bf16.msra.mxu0 %v2696
        %2828 = vmatprep.subr.bf16.mxu0 0
        %2829 = vmatpush1.bf16.msra.mxu0 %v2697
        %2830 = vmatprep.subr.bf16.mxu0 0
        %2831 = vmatpush1.bf16.msra.mxu0 %v2698
        %2832 = vmatprep.subr.bf16.mxu0 0
        %2833 = vmatpush1.bf16.msra.mxu0 %v2699
        %2834 = vmatprep.subr.bf16.mxu0 0
        %2835 = vmatpush1.bf16.msra.mxu0 %v2700
        %2836 = vmatprep.subr.bf16.mxu0 0
        %2837 = vmatpush1.bf16.msra.mxu0 %v2701
        %2838 = vmatprep.subr.bf16.mxu0 0
        %2839 = vmatpush1.bf16.msra.mxu0 %v2702
        %2840 = vmatprep.subr.bf16.mxu0 0
        %2841 = vmatpush1.bf16.msra.mxu0 %v2703
        %2842 = vmatprep.subr.bf16.mxu0 0
        %2843 = vmatpush1.bf16.msra.mxu0 %v2704
        %2844 = vmatprep.subr.bf16.mxu0 0
        %2845 = vmatpush1.bf16.msra.mxu0 %v2705
        %2846 = vmatprep.subr.bf16.mxu0 0
        %2847 = vmatpush1.bf16.msra.mxu0 %v2706
        %2848 = vmatprep.subr.bf16.mxu0 0
        %2849 = vmatpush1.bf16.msra.mxu0 %v2707
        %2850 = vmatprep.subr.bf16.mxu0 0
        %2851 = vmatpush1.bf16.msra.mxu0 %v2708
        %2852 = vmatprep.subr.bf16.mxu0 0
        %2853 = vmatpush1.bf16.msra.mxu0 %v2709
        %2854 = vmatprep.mubr.bf16.mxu0 %v2279
        %2855 = vmatmul.mubr.bf16.gmra.mrb[0].mxu0 %v2278
        %v2856 = vpop.f32.mrb[0].mxu0
        %v2857 = vadd.f32 0.0, %v2856
        %v2858 = vpop.f32.mrb[0].mxu0
        %v2859 = vpop.f32.mrb[0].mxu0
        %v2860 = vadd.f32 0.0, %v2859
        %v2861 = vpop.f32.mrb[0].mxu0
        %2862 = vmatprep.mubr.bf16.mxu0 %v2287
        %2863 = vmatmul.mubr.bf16.gmra.mrb[0].mxu0 %v2286
        %v2864 = vpop.f32.mrb[0].mxu0
        %v2865 = vadd.f32 0.0, %v2864
        %v2866 = vpop.f32.mrb[0].mxu0
        %v2867 = vpop.f32.mrb[0].mxu0
        %v2868 = vadd.f32 0.0, %v2867
        %v2869 = vpop.f32.mrb[0].mxu0
        %2870 = vmatprep.mubr.bf16.mxu0 %v2295
        %2871 = vmatmul.mubr.bf16.gmra.mrb[0].mxu0 %v2294
        %v2872 = vpop.f32.mrb[0].mxu0
        %v2873 = vadd.f32 0.0, %v2872
        %v2874 = vpop.f32.mrb[0].mxu0
        %v2875 = vpop.f32.mrb[0].mxu0
        %v2876 = vadd.f32 0.0, %v2875
        %v2877 = vpop.f32.mrb[0].mxu0
        %2878 = vmatprep.mubr.bf16.mxu0 %v2303
        %2879 = vmatmul.mubr.bf16.gmra.mrb[0].mxu0 %v2302
        %v2880 = vpop.f32.mrb[0].mxu0
        %v2881 = vadd.f32 0.0, %v2880
        %v2882 = vpop.f32.mrb[0].mxu0
        %v2883 = vpop.f32.mrb[0].mxu0
        %v2884 = vadd.f32 0.0, %v2883
        %v2885 = vpop.f32.mrb[0].mxu0
        %2886 = vdwg.mxu0
        %2887 = vmatprep.subr.bf16.mxu0 0
        %2888 = vmatpush1.bf16.msra.mxu0 %v2710
        %2889 = vmatprep.subr.bf16.mxu0 0
        %2890 = vmatpush1.bf16.msra.mxu0 %v2711
        %2891 = vmatprep.subr.bf16.mxu0 0
        %2892 = vmatpush1.bf16.msra.mxu0 %v2712
        %2893 = vmatprep.subr.bf16.mxu0 0
        %2894 = vmatpush1.bf16.msra.mxu0 %v2713
        %2895 = vmatprep.subr.bf16.mxu0 0
        %2896 = vmatpush1.bf16.msra.mxu0 %v2714
        %2897 = vmatprep.subr.bf16.mxu0 0
        %2898 = vmatpush1.bf16.msra.mxu0 %v2715
        %2899 = vmatprep.subr.bf16.mxu0 0
        %2900 = vmatpush1.bf16.msra.mxu0 %v2716
        %2901 = vmatprep.subr.bf16.mxu0 0
        %2902 = vmatpush1.bf16.msra.mxu0 %v2717
        %2903 = vmatprep.subr.bf16.mxu0 0
        %2904 = vmatpush1.bf16.msra.mxu0 %v2718
        %2905 = vmatprep.subr.bf16.mxu0 0
        %2906 = vmatpush1.bf16.msra.mxu0 %v2719
        %2907 = vmatprep.subr.bf16.mxu0 0
        %2908 = vmatpush1.bf16.msra.mxu0 %v2720
        %2909 = vmatprep.subr.bf16.mxu0 0
        %2910 = vmatpush1.bf16.msra.mxu0 %v2721
        %2911 = vmatprep.subr.bf16.mxu0 0
        %2912 = vmatpush1.bf16.msra.mxu0 %v2722
        %2913 = vmatprep.subr.bf16.mxu0 0
        %2914 = vmatpush1.bf16.msra.mxu0 %v2723
        %2915 = vmatprep.subr.bf16.mxu0 0
        %2916 = vmatpush1.bf16.msra.mxu0 %v2724
        %2917 = vmatprep.subr.bf16.mxu0 0
        %2918 = vmatpush1.bf16.msra.mxu0 %v2725
        %2919 = vmatprep.mubr.bf16.mxu0 %v2281
        %2920 = vmatmul.mubr.bf16.gmra.mrb[0].mxu0 %v2280
        %v2921 = vpop.f32.mrb[0].mxu0
        %v2922 = vadd.f32 %v2857, %v2921
        %v2923 = vpop.f32.mrb[0].mxu0
        %v2924 = vpop.f32.mrb[0].mxu0
        %v2925 = vadd.f32 %v2860, %v2924
        %v2926 = vpop.f32.mrb[0].mxu0
        %2927 = vmatprep.mubr.bf16.mxu0 %v2289
        %2928 = vmatmul.mubr.bf16.gmra.mrb[0].mxu0 %v2288
        %v2929 = vpop.f32.mrb[0].mxu0
        %v2930 = vadd.f32 %v2865, %v2929
        %v2931 = vpop.f32.mrb[0].mxu0
        %v2932 = vpop.f32.mrb[0].mxu0
        %v2933 = vadd.f32 %v2868, %v2932
        %v2934 = vpop.f32.mrb[0].mxu0
        %2935 = vmatprep.mubr.bf16.mxu0 %v2297
        %2936 = vmatmul.mubr.bf16.gmra.mrb[0].mxu0 %v2296
        %v2937 = vpop.f32.mrb[0].mxu0
        %v2938 = vadd.f32 %v2873, %v2937
        %v2939 = vpop.f32.mrb[0].mxu0
        %v2940 = vpop.f32.mrb[0].mxu0
        %v2941 = vadd.f32 %v2876, %v2940
        %v2942 = vpop.f32.mrb[0].mxu0
        %2943 = vmatprep.mubr.bf16.mxu0 %v2305
        %2944 = vmatmul.mubr.bf16.gmra.mrb[0].mxu0 %v2304
        %v2945 = vpop.f32.mrb[0].mxu0
        %v2946 = vadd.f32 %v2881, %v2945
        %v2947 = vpop.f32.mrb[0].mxu0
        %v2948 = vpop.f32.mrb[0].mxu0
        %v2949 = vadd.f32 %v2884, %v2948
        %v2950 = vpop.f32.mrb[0].mxu0
        %2951 = vdwg.mxu0
        %2952 = vmatprep.subr.bf16.mxu0 0
        %2953 = vmatpush1.bf16.msra.mxu0 %v2726
        %2954 = vmatprep.subr.bf16.mxu0 0
        %2955 = vmatpush1.bf16.msra.mxu0 %v2727
        %2956 = vmatprep.subr.bf16.mxu0 0
        %2957 = vmatpush1.bf16.msra.mxu0 %v2728
        %2958 = vmatprep.subr.bf16.mxu0 0
        %2959 = vmatpush1.bf16.msra.mxu0 %v2729
        %2960 = vmatprep.subr.bf16.mxu0 0
        %2961 = vmatpush1.bf16.msra.mxu0 %v2730
        %2962 = vmatprep.subr.bf16.mxu0 0
        %2963 = vmatpush1.bf16.msra.mxu0 %v2731
        %2964 = vmatprep.subr.bf16.mxu0 0
        %2965 = vmatpush1.bf16.msra.mxu0 %v2732
        %2966 = vmatprep.subr.bf16.mxu0 0
        %2967 = vmatpush1.bf16.msra.mxu0 %v2733
        %2968 = vmatprep.subr.bf16.mxu0 0
        %2969 = vmatpush1.bf16.msra.mxu0 %v2734
        %2970 = vmatprep.subr.bf16.mxu0 0
        %2971 = vmatpush1.bf16.msra.mxu0 %v2735
        %2972 = vmatprep.subr.bf16.mxu0 0
        %2973 = vmatpush1.bf16.msra.mxu0 %v2736
        %2974 = vmatprep.subr.bf16.mxu0 0
        %2975 = vmatpush1.bf16.msra.mxu0 %v2737
        %2976 = vmatprep.subr.bf16.mxu0 0
        %2977 = vmatpush1.bf16.msra.mxu0 %v2738
        %2978 = vmatprep.subr.bf16.mxu0 0
        %2979 = vmatpush1.bf16.msra.mxu0 %v2739
        %2980 = vmatprep.subr.bf16.mxu0 0
        %2981 = vmatpush1.bf16.msra.mxu0 %v2740
        %2982 = vmatprep.subr.bf16.mxu0 0
        %2983 = vmatpush1.bf16.msra.mxu0 %v2741
        %2984 = vmatprep.mubr.bf16.mxu0 %v2283
        %2985 = vmatmul.mubr.bf16.gmra.mrb[0].mxu0 %v2282
        %v2986 = vpop.f32.mrb[0].mxu0
        %v2987 = vadd.f32 %v2922, %v2986
        %v2988 = vpop.f32.mrb[0].mxu0
        %v2989 = vpop.f32.mrb[0].mxu0
        %v2990 = vadd.f32 %v2925, %v2989
        %v2991 = vpop.f32.mrb[0].mxu0
        %2992 = vmatprep.mubr.bf16.mxu0 %v2291
        %2993 = vmatmul.mubr.bf16.gmra.mrb[0].mxu0 %v2290
        %v2994 = vpop.f32.mrb[0].mxu0
        %v2995 = vadd.f32 %v2930, %v2994
        %v2996 = vpop.f32.mrb[0].mxu0
        %v2997 = vpop.f32.mrb[0].mxu0
        %v2998 = vadd.f32 %v2933, %v2997
        %v2999 = vpop.f32.mrb[0].mxu0
        %3000 = vmatprep.mubr.bf16.mxu0 %v2299
        %3001 = vmatmul.mubr.bf16.gmra.mrb[0].mxu0 %v2298
        %v3002 = vpop.f32.mrb[0].mxu0
        %v3003 = vadd.f32 %v2938, %v3002
        %v3004 = vpop.f32.mrb[0].mxu0
        %v3005 = vpop.f32.mrb[0].mxu0
        %v3006 = vadd.f32 %v2941, %v3005
        %v3007 = vpop.f32.mrb[0].mxu0
        %3008 = vmatprep.mubr.bf16.mxu0 %v2307
        %3009 = vmatmul.mubr.bf16.gmra.mrb[0].mxu0 %v2306
        %v3010 = vpop.f32.mrb[0].mxu0
        %v3011 = vadd.f32 %v2946, %v3010
        %v3012 = vpop.f32.mrb[0].mxu0
        %v3013 = vpop.f32.mrb[0].mxu0
        %v3014 = vadd.f32 %v2949, %v3013
        %v3015 = vpop.f32.mrb[0].mxu0
        %3016 = vdwg.mxu0
        %3017 = vmatprep.subr.bf16.mxu0 0
        %3018 = vmatpush1.bf16.msra.mxu0 %v2742
        %3019 = vmatprep.subr.bf16.mxu0 0
        %3020 = vmatpush1.bf16.msra.mxu0 %v2743
        %3021 = vmatprep.subr.bf16.mxu0 0
        %3022 = vmatpush1.bf16.msra.mxu0 %v2744
        %3023 = vmatprep.subr.bf16.mxu0 0
        %3024 = vmatpush1.bf16.msra.mxu0 %v2745
        %3025 = vmatprep.subr.bf16.mxu0 0
        %3026 = vmatpush1.bf16.msra.mxu0 %v2746
        %3027 = vmatprep.subr.bf16.mxu0 0
        %3028 = vmatpush1.bf16.msra.mxu0 %v2747
        %3029 = vmatprep.subr.bf16.mxu0 0
        %3030 = vmatpush1.bf16.msra.mxu0 %v2748
        %3031 = vmatprep.subr.bf16.mxu0 0
        %3032 = vmatpush1.bf16.msra.mxu0 %v2749
        %3033 = vmatprep.subr.bf16.mxu0 0
        %3034 = vmatpush1.bf16.msra.mxu0 %v2750
        %3035 = vmatprep.subr.bf16.mxu0 0
        %3036 = vmatpush1.bf16.msra.mxu0 %v2751
        %3037 = vmatprep.subr.bf16.mxu0 0
        %3038 = vmatpush1.bf16.msra.mxu0 %v2752
        %3039 = vmatprep.subr.bf16.mxu0 0
        %3040 = vmatpush1.bf16.msra.mxu0 %v2753
        %3041 = vmatprep.subr.bf16.mxu0 0
        %3042 = vmatpush1.bf16.msra.mxu0 %v2754
        %3043 = vmatprep.subr.bf16.mxu0 0
        %3044 = vmatpush1.bf16.msra.mxu0 %v2755
        %3045 = vmatprep.subr.bf16.mxu0 0
        %3046 = vmatpush1.bf16.msra.mxu0 %v2756
        %3047 = vmatprep.subr.bf16.mxu0 0
        %3048 = vmatpush1.bf16.msra.mxu0 %v2757
        %3049 = vmatprep.mubr.bf16.mxu0 %v2285
        %3050 = vmatmul.mubr.bf16.gmra.mrb[0].mxu0 %v2284
        %v3051 = vpop.f32.mrb[0].mxu0
        %v3052 = vadd.f32 %v2987, %v3051
        %v3053 = vpop.f32.mrb[0].mxu0
        %v3054 = vpop.f32.mrb[0].mxu0
        %v3055 = vadd.f32 %v2990, %v3054
        %v3056 = vpop.f32.mrb[0].mxu0
        %3057 = vmatprep.mubr.bf16.mxu0 %v2293
        %3058 = vmatmul.mubr.bf16.gmra.mrb[0].mxu0 %v2292
        %v3059 = vpop.f32.mrb[0].mxu0
        %v3060 = vadd.f32 %v2995, %v3059
        %v3061 = vpop.f32.mrb[0].mxu0
        %v3062 = vpop.f32.mrb[0].mxu0
        %v3063 = vadd.f32 %v2998, %v3062
        %v3064 = vpop.f32.mrb[0].mxu0
        %3065 = vmatprep.mubr.bf16.mxu0 %v2301
        %3066 = vmatmul.mubr.bf16.gmra.mrb[0].mxu0 %v2300
        %v3067 = vpop.f32.mrb[0].mxu0
        %v3068 = vadd.f32 %v3003, %v3067
        %v3069 = vpop.f32.mrb[0].mxu0
        %v3070 = vpop.f32.mrb[0].mxu0
        %v3071 = vadd.f32 %v3006, %v3070
        %v3072 = vpop.f32.mrb[0].mxu0
        %3073 = vmatprep.mubr.bf16.mxu0 %v2309
        %3074 = vmatmul.mubr.bf16.gmra.mrb[0].mxu0 %v2308
        %v3075 = vpop.f32.mrb[0].mxu0
        %v3076 = vadd.f32 %v3011, %v3075
        %v3077 = vpop.f32.mrb[0].mxu0
        %v3078 = vpop.f32.mrb[0].mxu0
        %v3079 = vadd.f32 %v3014, %v3078
        %v3080 = vpop.f32.mrb[0].mxu0
        %3081 = vdwg.mxu0
        %v3082 = vadd.f32 %v2270, %v3052
        %v3083 = vadd.f32 %v2271, %v3055
        %v3084 = vadd.f32 %v2272, %v3060
        %v3085 = vadd.f32 %v2273, %v3063
        %v3086 = vadd.f32 %v2274, %v3068
        %v3087 = vadd.f32 %v2275, %v3071
        %v3088 = vadd.f32 %v2276, %v3076
        %v3089 = vadd.f32 %v2277, %v3079
        %3090 = vst [vmem:[#allocation2] sm:$0xff] %v3082
        %3091 = vst [vmem:[#allocation2 + $0x8] sm:$0xff] %v3083
        %3092 = vst [vmem:[#allocation2 + $0x10] sm:$0xff] %v3084
        %3093 = vst [vmem:[#allocation2 + $0x18] sm:$0xff] %v3085
        %3094 = vst [vmem:[#allocation2 + $0x20] sm:$0xff] %v3086
        %3095 = vst [vmem:[#allocation2 + $0x28] sm:$0xff] %v3087
        %3096 = vst [vmem:[#allocation2 + $0x30] sm:$0xff] %v3088
        %3097 = vst [vmem:[#allocation2 + $0x38] sm:$0xff] %v3089
        // Predicated region
        $region69: #{telechat2_mlp.1} parent=43 // pred_check
          %p3098 = pneg %p396
        $region70: #{telechat2_mlp.1} parent=43 // pred_check_branch
          %3100 = sbr.rel (%p3098) target = $region72
        $region71: #{telechat2_mlp.1} parent=43 // pred_region
          %v3101 = vld [vmem:[#allocation2] sm:$0xff]
          %v3102 = vld [vmem:[#allocation2 + $0x8] sm:$0xff]
          %v3103 = vld [vmem:[#allocation2 + $0x10] sm:$0xff]
          %v3104 = vld [vmem:[#allocation2 + $0x18] sm:$0xff]
          %v3105 = vld [vmem:[#allocation2 + $0x20] sm:$0xff]
          %v3106 = vld [vmem:[#allocation2 + $0x28] sm:$0xff]
          %v3107 = vld [vmem:[#allocation2 + $0x30] sm:$0xff]
          %v3108 = vld [vmem:[#allocation2 + $0x38] sm:$0xff]
          %v3109 = vpack.c.bf16 %v3102, %v3101
          %v3110 = vpack.c.bf16 %v3104, %v3103
          %v3111 = vpack.c.bf16 %v3106, %v3105
          %v3112 = vpack.c.bf16 %v3108, %v3107
          %v3117 = vunpack.c.l.b16 %v3109
          %v3118 = vunpack.c.h.b16 %v3109
          %v3119 = vunpack.c.l.b16 %v3110
          %v3120 = vunpack.c.h.b16 %v3110
          %v3121 = vunpack.c.l.b16 %v3111
          %v3122 = vunpack.c.h.b16 %v3111
          %v3123 = vunpack.c.l.b16 %v3112
          %v3124 = vunpack.c.h.b16 %v3112
          %v3125 = vpack.c.b16 %v3117, %v3117
          %v3126 = vpack.c.b16 %v3118, %v3118
          %v3127 = vpack.c.b16 %v3119, %v3119
          %v3128 = vpack.c.b16 %v3120, %v3120
          %v3129 = vpack.c.b16 %v3121, %v3121
          %v3130 = vpack.c.b16 %v3122, %v3122
          %v3131 = vpack.c.b16 %v3123, %v3123
          %v3132 = vpack.c.b16 %v3124, %v3124
          %3141 = vst [vmem:[%s388] sm:$0xf] %v3125
          %3142 = vst [vmem:[%s388 + $0x4] sm:$0xf] %v3126
          %3143 = vst [vmem:[%s388 + $0x8] sm:$0xf] %v3127
          %3144 = vst [vmem:[%s388 + $0xc] sm:$0xf] %v3128
          %3145 = vst [vmem:[%s388 + $0x10] sm:$0xf] %v3129
          %3146 = vst [vmem:[%s388 + $0x14] sm:$0xf] %v3130
          %3147 = vst [vmem:[%s388 + $0x18] sm:$0xf] %v3131
          %3148 = vst [vmem:[%s388 + $0x1c] sm:$0xf] %v3132
        $region72: #{telechat2_mlp.1} parent=43 // pred_fallthru
          _
        %s3149 = sand.u32 %s198, 1
        %s3150 = scalar_lea.sflag [#allocation5], %s3149
        %s3151 = sand.u32 %s198, 1
        %s3152 = smul.addr %s3151, 32
        %s3153 = scalar_lea.vmem [#allocation12], %s3152
        // Predicated region
        $region73: #{telechat2_mlp.1} parent=43 // pred_check
          %p3154 = pneg %p208
        $region74: #{telechat2_mlp.1} parent=43 // pred_check_branch
          %3156 = sbr.rel (%p3154) target = $region76
        $region75: #{telechat2_mlp.1} parent=43 // pred_region
          %s3157 = smul.u32 8, %s31
          %s3159 = ssub.s32 512, 512
          %3160 = vsyncadd %s3150, %s3159
          %s3161 = smul.addr %s3157, 64
          %s3162 = scalar_lea.hbm %s6, %s3161
          %s3163 = sshll.u32 %s3153, 4
          %s3164 = int_to_ptr.vmem [resolvable:$true] %s3163
          %3169 = dma.vmem_to_hbm [thread:$0]  %s3164, 512, %s3162, %s3150, 64, 64, 4
        $region76: #{telechat2_mlp.1} parent=43 // pred_fallthru
          _
      $region44: #{telechat2_mlp.1} parent=5 // pred_fallthru
        _
      %p3170 = scmp.le.s32.totalorder 2, %s22
      // Predicated region
      $region77: #{telechat2_mlp.1} parent=5 // pred_check
        %p3171 = pneg %p3170
      $region78: #{telechat2_mlp.1} parent=5 // pred_check_branch
        %3173 = sbr.rel (%p3171) target = $region80
      $region79: #{telechat2_mlp.1} parent=5 // pred_region
        %s3174 = ssub.s32 %s22, 2
        // Predicated region
        $region81: #{telechat2_mlp.1} parent=79 // pred_check
          %p3175 = pneg %p214
        $region82: #{telechat2_mlp.1} parent=79 // pred_check_branch
          %3177 = sbr.rel (%p3175) target = $region84
        $region83: #{telechat2_mlp.1} parent=79 // pred_region
          %s3178 = sand.u32 %s199, 1
          %s3179 = scalar_lea.sflag [#allocation5], %s3178
          %s3180 = sand.u32 %s199, 1
          %s3181 = smul.addr %s3180, 32
          %s3182 = scalar_lea.vmem [#allocation12], %s3181
          %3183 = dma.done %s3179, 512
        $region84: #{telechat2_mlp.1} parent=79 // pred_fallthru
          _
      $region80: #{telechat2_mlp.1} parent=5 // pred_fallthru
        _
    $region6: #{telechat2_mlp.1} parent=1 // loop_footer
      %s26 = sadd.s32 1, %s22
    $region7: #{telechat2_mlp.1} parent=1 // loop_footer_branch
      %21 = sbr.rel target = $region3
    $region8: #{telechat2_mlp.1} parent=1 // loop_exit
      _
    %3184 = vsyncpa [#allocation4], 1
    %s3185 = scalar_lea.sflag [#allocation4], 1
    %3186 = vsyncpa %s3185, 1
    %3187 = vsyncpa [#allocation7], 1
    %s3188 = scalar_lea.sflag [#allocation7], 1
    %3189 = vsyncpa %s3188, 1
    %3190 = vsyncpa [#allocation10], 1
    %3191 = vsyncpa [#allocation5], 1
    %s3192 = scalar_lea.sflag [#allocation5], 1
    %3193 = vsyncpa %s3192, 1

</llo_original>
